<compile_context>
chip_gen: v5e
topology: v5e:2x2
jax: 0.10.0
libtpu: 0.0.40
codegen_flags: <defaults>
</compile_context>

<pallas_src>
import functools
import math

import jax
import jax.numpy as jnp
from jax.experimental import pallas as pl
from jax.experimental.pallas import tpu as pltpu


# ----------------------------------------------------------------------------
# Kernel
# ----------------------------------------------------------------------------
def dagmm_kernel(x_ref, w1_ref, b1_ref, w2_ref, b2_ref, w3_ref, b3_ref,
                 w4_ref, b4_ref, mu_ref, cblk_ref, rneg_ref, lnorm_ref,
                 o_ref, *, act_dtype):
    """One batch tile, feature-major layout (batch on lanes).

    x_ref:     [D_IN, TB]        input tile (bf16 or f32)
    wN_ref:    [out, in]         weights (same dtype as x), bN_ref: [out, 1] f32
    mu_ref:    [K*Dz, 1]   f32   stacked mixture means
    cblk_ref:  [K*Dz, K*Dz] f32  block-diagonal stacked covariance inverses
    rneg_ref:  [Kp, K*Dz]  f32   block reduction matrix with -0.5 entries
    lnorm_ref: [Kp, 1]     f32   log-normalizers (padded rows = -1e30)
    o_ref:     [1, TB]     f32   per-sample energy (lane dense)
    """
    f32 = jnp.float32
    eps = 1e-6

    x = x_ref[...]                              # [D_IN, TB]
    op_dtype = x.dtype
    tb = x.shape[1]

    def linear(w_ref, b_ref, h):
        # W @ H keeps the batch on lanes; f32 accumulation + f32 bias splat.
        return (jnp.dot(w_ref[...], h, preferred_element_type=f32)
                + b_ref[...])

    # ---- compression network ----
    h1 = jnp.tanh(linear(w1_ref, b1_ref, x).astype(act_dtype)).astype(op_dtype)
    enc = linear(w2_ref, b2_ref, h1)                         # [H2, TB] f32
    h2 = jnp.tanh(
        linear(w3_ref, b3_ref, enc.astype(op_dtype)).astype(act_dtype)
    ).astype(op_dtype)
    dec = linear(w4_ref, b4_ref, h2)                         # [D_IN, TB] f32

    # ---- reconstruction feature (lane-dense sublane reductions, f32) ----
    xf = x.astype(f32)
    diff = xf - dec
    sum_x2 = jnp.sum(xf * xf, axis=0, keepdims=True)         # [1, TB]
    sum_d2 = jnp.sum(diff * diff, axis=0, keepdims=True)     # [1, TB]
    # rel_ed = ||x-dec|| / max(||x||, eps) == sqrt(sum_d2 / max(sum_x2, eps^2))
    rel_ed = jnp.sqrt(sum_d2 / jnp.maximum(sum_x2, eps * eps))

    # Reference bug reproduced: cosine_sim = relative_ed.view(-1, 1), hence
    # z = [enc, rel_ed, rel_ed]; the real cosine similarity is dead code.

    # ---- GMM energy, centered formulation (f32 for accuracy) ----
    z = jnp.concatenate([enc, rel_ed, rel_ed], axis=0)       # [Dz, TB]
    dz = z.shape[0]
    k = mu_ref.shape[0] // dz                                # K (static)
    zk = jnp.concatenate([z] * k, axis=0)                    # [K*Dz, TB]
    d = zk - mu_ref[...]                                     # centered per-k
    t = jnp.dot(cblk_ref[...], d, preferred_element_type=f32)   # C_k (z-mu_k)
    # logits_k = lognorm_k - 0.5 * sum_i d_k,i (C_k d_k)_i   (Kp x TB)
    logits = (jnp.dot(rneg_ref[...], t * d, preferred_element_type=f32)
              + lnorm_ref[...])
    m = jnp.max(logits, axis=0, keepdims=True)               # [1, TB]
    s = jnp.sum(jnp.exp(logits - m), axis=0, keepdims=True)
    o_ref[...] = -(m + jnp.log(s))                           # [1, TB]

    # TODO(synk): if bundle dumps show MXU/EUP dependency bubbles, split the
    # tile into two independent column halves (explicit unroll) for overlap.


# ----------------------------------------------------------------------------
# Host-side packing (hoisted out of the per-call path — call once per params)
# ----------------------------------------------------------------------------
def _round_up(v, m):
    return (v + m - 1) // m * m


def pack_dagmm_params(params, compute_dtype=jnp.bfloat16):
    """Pack torch-layout parameters into the kernel's slabs.

    Weights become [out, in] in `compute_dtype` (bf16 for MXU-native matmuls),
    biases stay f32 [out, 1].  GMM params are folded into a block-diagonal
    covariance-inverse slab, a stacked-mean column, a -0.5 block-reduction
    matrix and a log-normalizer column (all f32).
    """
    we1, be1, we2, be2, wd1, bd1, wd2, bd2, mu, covinv, lognorm = params
    cd = compute_dtype

    def wpack(w):
        return jnp.asarray(w, jnp.float32).T.astype(cd)      # [out, in]

    def bpack(b):
        return jnp.reshape(jnp.asarray(b, jnp.float32), (-1, 1))  # [out, 1]

    K, Dz = mu.shape
    kdz = K * Dz
    kp = _round_up(K, 8)
    cblk = jnp.zeros((kdz, kdz), jnp.float32)
    rneg = jnp.zeros((kp, kdz), jnp.float32)
    for k in range(K):
        cblk = cblk.at[k * Dz:(k + 1) * Dz, k * Dz:(k + 1) * Dz].set(
            covinv[k].astype(jnp.float32))
        rneg = rneg.at[k, k * Dz:(k + 1) * Dz].set(-0.5)
    mu_col = jnp.reshape(mu.astype(jnp.float32), (kdz, 1))
    lnorm_col = jnp.full((kp, 1), -1e30, jnp.float32).at[:K, 0].set(
        lognorm.astype(jnp.float32))

    return (wpack(we1), bpack(be1), wpack(we2), bpack(be2),
            wpack(wd1), bpack(bd1), wpack(wd2), bpack(bd2),
            mu_col, cblk, rneg, lnorm_col)


def _chip_supports_bf16_eup():
    """bf16 VPU/EUP exists on v6e/v7x; keep f32 transcendentals on <= v5."""
    try:
        kind = jax.devices()[0].device_kind.lower()
    except Exception:
        return False
    return not any(t in kind for t in ("v2", "v3", "v4", "v5"))


# ----------------------------------------------------------------------------
# Wrapper
# ----------------------------------------------------------------------------
def dagmm_forward(x, packed_params, *, block_b=4096, n_min_tiles=4):
    """Per-sample energies for x: [B, D_IN].  packed_params from pack_dagmm_params."""
    (w1, b1, w2, b2, w3, b3, w4, b4, mu_col, cblk, rneg, lnorm) = packed_params
    B, d_in = x.shape
    compute_dtype = w1.dtype

    # Adaptive batch tile: big enough to amortize per-step overhead, but
    # capped so the grid has >= n_min_tiles steps (keeps v7x's 2 TensorCores
    # busy via the "parallel" axis and balances the ragged last tile).
    tb = _round_up(max(1, -(-B // n_min_tiles)), 128)
    tb = min(tb, _round_up(block_b, 128))
    tb = max(tb, 128)
    b_pad = _round_up(B, tb)

    # NOTE: this cast+pad+transpose is a one-time XLA layout pass over x
    # (feature-major [D_IN, B] with batch on lanes is what the kernel wants).
    # For large B, produce x feature-major upstream to avoid paying for the
    # flip on every call.
    x_t = jnp.pad(x.astype(compute_dtype), ((0, b_pad - B), (0, 0))).T

    # bf16 transcendentals only when streaming bf16 AND the chip's EUP has it.
    use_bf16_act = (compute_dtype == jnp.bfloat16) and _chip_supports_bf16_eup()
    act_dtype = jnp.bfloat16 if use_bf16_act else jnp.float32

    def const_spec(shape):
        return pl.BlockSpec(shape, lambda i, _n=len(shape): (0,) * _n)

    params_list = (w1, b1, w2, b2, w3, b3, w4, b4, mu_col, cblk, rneg, lnorm)
    grid_spec = pltpu.PrefetchScalarGridSpec(
        num_scalar_prefetch=0,
        grid=(b_pad // tb,),
        in_specs=[pl.BlockSpec((d_in, tb), lambda i: (0, i))]      # streamed x
                 + [const_spec(p.shape) for p in params_list],     # resident
        out_specs=pl.BlockSpec((1, tb), lambda i: (0, i)),
    )

    out = pl.pallas_call(
        functools.partial(dagmm_kernel, act_dtype=act_dtype),
        out_shape=jax.ShapeDtypeStruct((1, b_pad), jnp.float32),
        grid_spec=grid_spec,
        compiler_params=pltpu.CompilerParams(
            dimension_semantics=("parallel",)),
    )(x_t, *params_list)
    return out[0, :B]


# ----------------------------------------------------------------------------
# Pure-JAX reference (f32, HIGHEST precision) for correctness checking
# ----------------------------------------------------------------------------
def dagmm_ref(x, params, quantize_dtype=None):
    we1, be1, we2, be2, wd1, bd1, wd2, bd2, mu, covinv, lognorm = params
    if quantize_dtype is not None:
        # Round the streamed tensor and weights through the kernel's compute
        # dtype so the comparison isolates kernel-math error from input
        # quantization (biases / GMM params stay f32 in the kernel).
        q = lambda a: a.astype(quantize_dtype).astype(jnp.float32)
        x, we1, we2, wd1, wd2 = q(x), q(we1), q(we2), q(wd1), q(wd2)
    eps = 1e-6
    hp = jax.lax.Precision.HIGHEST
    h = jnp.tanh(jnp.dot(x, we1, precision=hp) + be1)
    enc = jnp.dot(h, we2, precision=hp) + be2
    h2 = jnp.tanh(jnp.dot(enc, wd1, precision=hp) + bd1)
    dec = jnp.dot(h2, wd2, precision=hp) + bd2
    rel = (jnp.linalg.norm(x - dec, axis=1, keepdims=True)
           / jnp.maximum(jnp.linalg.norm(x, axis=1, keepdims=True), eps))
    z = jnp.concatenate([enc, rel, rel], axis=1)
    d = z[:, None, :] - mu[None]
    quad = jnp.einsum('bki,kij,bkj->bk', d, covinv, d, precision=hp)
    logits = lognorm[None, :] - 0.5 * quad
    return -jax.scipy.special.logsumexp(logits, axis=1)


# ----------------------------------------------------------------------------
# Demo / self-check
# ----------------------------------------------------------------------------
if __name__ == "__main__":
    # Shapes implied by the module:
    #   input_size=16, comp_hiddens=[8, 2], est_hiddens=[8, 4]
    #   => dimension_embedding Dz = 2 + 2 = 4, num_mixtures K = 4
    # B=2000 exercises the multi-tile grid (4 steps) + ragged-batch padding.
    B, D_IN, H1, H2, K = 2000, 16, 8, 2, 4
    Dz = H2 + 2

    key = jax.random.PRNGKey(0)
    ks = jax.random.split(key, 12)

    def init(k, shape, scale=0.3):
        return (scale * jax.random.normal(k, shape)).astype(jnp.float32)

    # Compression network weights (torch layout [in, out], y = x @ W + b).
    we1 = init(ks[0], (D_IN, H1)); be1 = init(ks[1], (1, H1), 0.1)
    we2 = init(ks[2], (H1, H2));   be2 = init(ks[3], (1, H2), 0.1)
    wd1 = init(ks[4], (H2, H1));   bd1 = init(ks[5], (1, H1), 0.1)
    wd2 = init(ks[6], (H1, D_IN)); bd2 = init(ks[7], (1, D_IN), 0.1)

    # GMM parameters (normally produced by _update_mixtures_parameters during
    # training; here initialized deterministically).
    phi = jnp.ones((K,), jnp.float32) / K
    mu = init(ks[8], (K, Dz), 1.0)
    A = init(ks[9], (K, Dz, Dz), 0.2)
    cov = jnp.eye(Dz, dtype=jnp.float32)[None] + jnp.einsum('kij,klj->kil', A, A)
    covinv = jnp.linalg.inv(cov).astype(jnp.float32)
    logdet = jnp.linalg.slogdet(cov)[1]
    lognorm = (jnp.log(phi)
               - 0.5 * (Dz * math.log(2.0 * math.pi) + logdet)).astype(jnp.float32)

    x = init(ks[10], (B, D_IN), 1.0)
    params = (we1, be1, we2, be2, wd1, bd1, wd2, bd2, mu, covinv, lognorm)

    # --- fast path: bf16 streaming / bf16 MXU operands (packing hoisted) ---
    packed_bf16 = pack_dagmm_params(params, compute_dtype=jnp.bfloat16)
    e_bf16 = dagmm_forward(x, packed_bf16)
    jax.block_until_ready(e_bf16)

    # --- f32 path: validates exact module semantics tightly ---
    packed_f32 = pack_dagmm_params(params, compute_dtype=jnp.float32)
    e_f32 = dagmm_forward(x, packed_f32)
    jax.block_until_ready(e_f32)

    ref = dagmm_ref(x, params)
    ref_q = dagmm_ref(x, params, quantize_dtype=jnp.bfloat16)

    assert e_f32.shape == (B,) and e_bf16.shape == (B,)
    err_f32 = float(jnp.max(jnp.abs(e_f32 - ref)))
    assert jnp.allclose(e_f32, ref, atol=2e-3, rtol=2e-3), err_f32
    # bf16 path checked against the bf16-quantized-input reference; residual
    # differences come from in-kernel activation rounding / bf16 tanh.
    err_bf16 = float(jnp.max(jnp.abs(e_bf16 - ref_q)))
    assert jnp.allclose(e_bf16, ref_q, atol=1.5e-1, rtol=3e-2), err_bf16

    # TODO(synk): training-only paths (estimation network forward, GMM mixture
    # parameter update from gamma, dropout) are not part of the eval forward
    # and are not implemented.
    print("KERNEL_OK")
</pallas_src>

<mosaic_0001>
module attributes {stable_mosaic.version = 11 : i64} {
  func.func @dagmm_kernel(%arg0: i32, %arg1: memref<16x512xbf16, #tpu.memory_space<vmem>>, %arg2: memref<8x16xbf16, #tpu.memory_space<vmem>>, %arg3: memref<8x1xf32, #tpu.memory_space<vmem>>, %arg4: memref<2x8xbf16, #tpu.memory_space<vmem>>, %arg5: memref<2x1xf32, #tpu.memory_space<vmem>>, %arg6: memref<8x2xbf16, #tpu.memory_space<vmem>>, %arg7: memref<8x1xf32, #tpu.memory_space<vmem>>, %arg8: memref<16x8xbf16, #tpu.memory_space<vmem>>, %arg9: memref<16x1xf32, #tpu.memory_space<vmem>>, %arg10: memref<16x1xf32, #tpu.memory_space<vmem>>, %arg11: memref<16x16xf32, #tpu.memory_space<vmem>>, %arg12: memref<8x16xf32, #tpu.memory_space<vmem>>, %arg13: memref<8x1xf32, #tpu.memory_space<vmem>>, %arg14: memref<1x512xf32, #tpu.memory_space<vmem>>) attributes {dimension_semantics = [#tpu.dimension_semantics<parallel>], iteration_bounds = array<i64: 4>, scalar_prefetch = 0 : i64, scratch_operands = 0 : i64, tpu.core_type = #tpu.core_type<tc>, window_params = [{transform_indices = @transform_0, window_bounds = array<i64: 16, 512>}, {pipeline_mode = #tpu.pipeline_mode<synchronous>, transform_indices = @transform_1, window_bounds = array<i64: 8, 16>}, {pipeline_mode = #tpu.pipeline_mode<synchronous>, transform_indices = @transform_2, window_bounds = array<i64: 8, 1>}, {pipeline_mode = #tpu.pipeline_mode<synchronous>, transform_indices = @transform_3, window_bounds = array<i64: 2, 8>}, {pipeline_mode = #tpu.pipeline_mode<synchronous>, transform_indices = @transform_4, window_bounds = array<i64: 2, 1>}, {pipeline_mode = #tpu.pipeline_mode<synchronous>, transform_indices = @transform_5, window_bounds = array<i64: 8, 2>}, {pipeline_mode = #tpu.pipeline_mode<synchronous>, transform_indices = @transform_6, window_bounds = array<i64: 8, 1>}, {pipeline_mode = #tpu.pipeline_mode<synchronous>, transform_indices = @transform_7, window_bounds = array<i64: 16, 8>}, {pipeline_mode = #tpu.pipeline_mode<synchronous>, transform_indices = @transform_8, window_bounds = array<i64: 16, 1>}, {pipeline_mode = #tpu.pipeline_mode<synchronous>, transform_indices = @transform_9, window_bounds = array<i64: 16, 1>}, {pipeline_mode = #tpu.pipeline_mode<synchronous>, transform_indices = @transform_10, window_bounds = array<i64: 16, 16>}, {pipeline_mode = #tpu.pipeline_mode<synchronous>, transform_indices = @transform_11, window_bounds = array<i64: 8, 16>}, {pipeline_mode = #tpu.pipeline_mode<synchronous>, transform_indices = @transform_12, window_bounds = array<i64: 8, 1>}, {transform_indices = @transform_13, window_bounds = array<i64: 1, 512>}]} {
    %c0 = arith.constant 0 : index
    %c0_0 = arith.constant 0 : index
    %0 = vector.load %arg1[%c0, %c0_0] : memref<16x512xbf16, #tpu.memory_space<vmem>>, vector<16x512xbf16>
    %c0_1 = arith.constant 0 : index
    %c0_2 = arith.constant 0 : index
    %1 = vector.load %arg2[%c0_1, %c0_2] : memref<8x16xbf16, #tpu.memory_space<vmem>>, vector<8x16xbf16>
    %cst = arith.constant dense<0.000000e+00> : vector<8x512xf32>
    %2 = tpu.matmul %1, %0, %cst {dimension_numbers = #tpu.dot_dimension_numbers<[1], [0], [0], [1], [0, 0, 1, 1], [], []>} : vector<8x16xbf16>, vector<16x512xbf16>, vector<8x512xf32> -> vector<8x512xf32>
    %c0_3 = arith.constant 0 : index
    %c0_4 = arith.constant 0 : index
    %3 = vector.load %arg3[%c0_3, %c0_4] : memref<8x1xf32, #tpu.memory_space<vmem>>, vector<8x1xf32>
    %4 = vector.broadcast %3 : vector<8x1xf32> to vector<8x512xf32>
    %5 = arith.addf %2, %4 : vector<8x512xf32>
    %6 = arith.truncf %5 : vector<8x512xf32> to vector<8x512xbf16>
    %7 = math.tanh %6 : vector<8x512xbf16>
    %c0_5 = arith.constant 0 : index
    %c0_6 = arith.constant 0 : index
    %8 = vector.load %arg4[%c0_5, %c0_6] : memref<2x8xbf16, #tpu.memory_space<vmem>>, vector<2x8xbf16>
    %cst_7 = arith.constant dense<0.000000e+00> : vector<2x512xf32>
    %9 = tpu.matmul %8, %7, %cst_7 {dimension_numbers = #tpu.dot_dimension_numbers<[1], [0], [0], [1], [0, 0, 1, 1], [], []>} : vector<2x8xbf16>, vector<8x512xbf16>, vector<2x512xf32> -> vector<2x512xf32>
    %c0_8 = arith.constant 0 : index
    %c0_9 = arith.constant 0 : index
    %10 = vector.load %arg5[%c0_8, %c0_9] : memref<2x1xf32, #tpu.memory_space<vmem>>, vector<2x1xf32>
    %11 = vector.broadcast %10 : vector<2x1xf32> to vector<2x512xf32>
    %12 = arith.addf %9, %11 : vector<2x512xf32>
    %13 = arith.truncf %12 : vector<2x512xf32> to vector<2x512xbf16>
    %c0_10 = arith.constant 0 : index
    %c0_11 = arith.constant 0 : index
    %14 = vector.load %arg6[%c0_10, %c0_11] : memref<8x2xbf16, #tpu.memory_space<vmem>>, vector<8x2xbf16>
    %cst_12 = arith.constant dense<0.000000e+00> : vector<8x512xf32>
    %15 = tpu.matmul %14, %13, %cst_12 {dimension_numbers = #tpu.dot_dimension_numbers<[1], [0], [0], [1], [0, 0, 1, 1], [], []>} : vector<8x2xbf16>, vector<2x512xbf16>, vector<8x512xf32> -> vector<8x512xf32>
    %c0_13 = arith.constant 0 : index
    %c0_14 = arith.constant 0 : index
    %16 = vector.load %arg7[%c0_13, %c0_14] : memref<8x1xf32, #tpu.memory_space<vmem>>, vector<8x1xf32>
    %17 = vector.broadcast %16 : vector<8x1xf32> to vector<8x512xf32>
    %18 = arith.addf %15, %17 : vector<8x512xf32>
    %19 = arith.truncf %18 : vector<8x512xf32> to vector<8x512xbf16>
    %20 = math.tanh %19 : vector<8x512xbf16>
    %c0_15 = arith.constant 0 : index
    %c0_16 = arith.constant 0 : index
    %21 = vector.load %arg8[%c0_15, %c0_16] : memref<16x8xbf16, #tpu.memory_space<vmem>>, vector<16x8xbf16>
    %cst_17 = arith.constant dense<0.000000e+00> : vector<16x512xf32>
    %22 = tpu.matmul %21, %20, %cst_17 {dimension_numbers = #tpu.dot_dimension_numbers<[1], [0], [0], [1], [0, 0, 1, 1], [], []>} : vector<16x8xbf16>, vector<8x512xbf16>, vector<16x512xf32> -> vector<16x512xf32>
    %c0_18 = arith.constant 0 : index
    %c0_19 = arith.constant 0 : index
    %23 = vector.load %arg9[%c0_18, %c0_19] : memref<16x1xf32, #tpu.memory_space<vmem>>, vector<16x1xf32>
    %24 = vector.broadcast %23 : vector<16x1xf32> to vector<16x512xf32>
    %25 = arith.addf %22, %24 : vector<16x512xf32>
    %26 = arith.extf %0 : vector<16x512xbf16> to vector<16x512xf32>
    %27 = arith.subf %26, %25 : vector<16x512xf32>
    %28 = arith.mulf %26, %26 : vector<16x512xf32>
    %cst_20 = arith.constant dense<0.000000e+00> : vector<512xf32>
    %29 = vector.multi_reduction <add>, %28, %cst_20 [0] : vector<16x512xf32> to vector<512xf32>
    %30 = vector.shape_cast %29 : vector<512xf32> to vector<1x512xf32>
    %31 = arith.mulf %27, %27 : vector<16x512xf32>
    %cst_21 = arith.constant dense<0.000000e+00> : vector<512xf32>
    %32 = vector.multi_reduction <add>, %31, %cst_21 [0] : vector<16x512xf32> to vector<512xf32>
    %33 = vector.shape_cast %32 : vector<512xf32> to vector<1x512xf32>
    %cst_22 = arith.constant 9.99999996E-13 : f32
    %34 = vector.broadcast %cst_22 : f32 to vector<1x512xf32>
    %35 = arith.maximumf %30, %34 : vector<1x512xf32>
    %36 = arith.divf %33, %35 : vector<1x512xf32>
    %37 = math.sqrt %36 : vector<1x512xf32>
    %38 = tpu.concatenate %12, %37, %37 in 0 : vector<2x512xf32>, vector<1x512xf32>, vector<1x512xf32> -> vector<4x512xf32>
    %39 = tpu.concatenate %38, %38, %38, %38 in 0 : vector<4x512xf32>, vector<4x512xf32>, vector<4x512xf32>, vector<4x512xf32> -> vector<16x512xf32>
    %c0_23 = arith.constant 0 : index
    %c0_24 = arith.constant 0 : index
    %40 = vector.load %arg10[%c0_23, %c0_24] : memref<16x1xf32, #tpu.memory_space<vmem>>, vector<16x1xf32>
    %41 = vector.broadcast %40 : vector<16x1xf32> to vector<16x512xf32>
    %42 = arith.subf %39, %41 : vector<16x512xf32>
    %c0_25 = arith.constant 0 : index
    %c0_26 = arith.constant 0 : index
    %43 = vector.load %arg11[%c0_25, %c0_26] : memref<16x16xf32, #tpu.memory_space<vmem>>, vector<16x16xf32>
    %cst_27 = arith.constant dense<0.000000e+00> : vector<16x512xf32>
    %44 = tpu.matmul %43, %42, %cst_27 {dimension_numbers = #tpu.dot_dimension_numbers<[1], [0], [0], [1], [0, 0, 1, 1], [], []>} : vector<16x16xf32>, vector<16x512xf32>, vector<16x512xf32> -> vector<16x512xf32>
    %c0_28 = arith.constant 0 : index
    %c0_29 = arith.constant 0 : index
    %45 = vector.load %arg12[%c0_28, %c0_29] : memref<8x16xf32, #tpu.memory_space<vmem>>, vector<8x16xf32>
    %46 = arith.mulf %44, %42 : vector<16x512xf32>
    %cst_30 = arith.constant dense<0.000000e+00> : vector<8x512xf32>
    %47 = tpu.matmul %45, %46, %cst_30 {dimension_numbers = #tpu.dot_dimension_numbers<[1], [0], [0], [1], [0, 0, 1, 1], [], []>} : vector<8x16xf32>, vector<16x512xf32>, vector<8x512xf32> -> vector<8x512xf32>
    %c0_31 = arith.constant 0 : index
    %c0_32 = arith.constant 0 : index
    %48 = vector.load %arg13[%c0_31, %c0_32] : memref<8x1xf32, #tpu.memory_space<vmem>>, vector<8x1xf32>
    %49 = vector.broadcast %48 : vector<8x1xf32> to vector<8x512xf32>
    %50 = arith.addf %47, %49 : vector<8x512xf32>
    %cst_33 = arith.constant dense<0xFF800000> : vector<512xf32>
    %51 = vector.multi_reduction <maximumf>, %50, %cst_33 [0] : vector<8x512xf32> to vector<512xf32>
    %52 = vector.shape_cast %51 : vector<512xf32> to vector<1x512xf32>
    %53 = vector.broadcast %52 : vector<1x512xf32> to vector<8x512xf32>
    %54 = arith.subf %50, %53 : vector<8x512xf32>
    %55 = math.exp %54 : vector<8x512xf32>
    %cst_34 = arith.constant dense<0.000000e+00> : vector<512xf32>
    %56 = vector.multi_reduction <add>, %55, %cst_34 [0] : vector<8x512xf32> to vector<512xf32>
    %57 = vector.shape_cast %56 : vector<512xf32> to vector<1x512xf32>
    %58 = math.log %57 : vector<1x512xf32>
    %59 = arith.addf %52, %58 : vector<1x512xf32>
    %cst_35 = arith.constant 0.000000e+00 : f32
    %60 = vector.broadcast %cst_35 : f32 to vector<1x512xf32>
    %61 = arith.subf %60, %59 : vector<1x512xf32>
    %c0_36 = arith.constant 0 : index
    %c0_37 = arith.constant 0 : index
    %62 = vector.load %arg14[%c0_36, %c0_37] : memref<1x512xf32, #tpu.memory_space<vmem>>, vector<1x512xf32>
    tpu.vector_store %arg14[%c0_36, %c0_37], %61 {strides = array<i32>} : memref<1x512xf32, #tpu.memory_space<vmem>>, vector<1x512xf32>,
    return
  }
  func.func @transform_0(%arg0: i32) -> (i32, i32) {
    %c0_i32 = arith.constant 0 : i32
    %c0_i32_0 = arith.constant 0 : i32
    return %c0_i32, %arg0 : i32, i32
  }
  func.func @transform_1(%arg0: i32) -> (i32, i32) {
    %c0_i32 = arith.constant 0 : i32
    %c0_i32_0 = arith.constant 0 : i32
    %c0_i32_1 = arith.constant 0 : i32
    return %c0_i32, %c0_i32_0 : i32, i32
  }
  func.func @transform_2(%arg0: i32) -> (i32, i32) {
    %c0_i32 = arith.constant 0 : i32
    %c0_i32_0 = arith.constant 0 : i32
    %c0_i32_1 = arith.constant 0 : i32
    return %c0_i32, %c0_i32_0 : i32, i32
  }
  func.func @transform_3(%arg0: i32) -> (i32, i32) {
    %c0_i32 = arith.constant 0 : i32
    %c0_i32_0 = arith.constant 0 : i32
    %c0_i32_1 = arith.constant 0 : i32
    return %c0_i32, %c0_i32_0 : i32, i32
  }
  func.func @transform_4(%arg0: i32) -> (i32, i32) {
    %c0_i32 = arith.constant 0 : i32
    %c0_i32_0 = arith.constant 0 : i32
    %c0_i32_1 = arith.constant 0 : i32
    return %c0_i32, %c0_i32_0 : i32, i32
  }
  func.func @transform_5(%arg0: i32) -> (i32, i32) {
    %c0_i32 = arith.constant 0 : i32
    %c0_i32_0 = arith.constant 0 : i32
    %c0_i32_1 = arith.constant 0 : i32
    return %c0_i32, %c0_i32_0 : i32, i32
  }
  func.func @transform_6(%arg0: i32) -> (i32, i32) {
    %c0_i32 = arith.constant 0 : i32
    %c0_i32_0 = arith.constant 0 : i32
    %c0_i32_1 = arith.constant 0 : i32
    return %c0_i32, %c0_i32_0 : i32, i32
  }
  func.func @transform_7(%arg0: i32) -> (i32, i32) {
    %c0_i32 = arith.constant 0 : i32
    %c0_i32_0 = arith.constant 0 : i32
    %c0_i32_1 = arith.constant 0 : i32
    return %c0_i32, %c0_i32_0 : i32, i32
  }
  func.func @transform_8(%arg0: i32) -> (i32, i32) {
    %c0_i32 = arith.constant 0 : i32
    %c0_i32_0 = arith.constant 0 : i32
    %c0_i32_1 = arith.constant 0 : i32
    return %c0_i32, %c0_i32_0 : i32, i32
  }
  func.func @transform_9(%arg0: i32) -> (i32, i32) {
    %c0_i32 = arith.constant 0 : i32
    %c0_i32_0 = arith.constant 0 : i32
    %c0_i32_1 = arith.constant 0 : i32
    return %c0_i32, %c0_i32_0 : i32, i32
  }
  func.func @transform_10(%arg0: i32) -> (i32, i32) {
    %c0_i32 = arith.constant 0 : i32
    %c0_i32_0 = arith.constant 0 : i32
    %c0_i32_1 = arith.constant 0 : i32
    return %c0_i32, %c0_i32_0 : i32, i32
  }
  func.func @transform_11(%arg0: i32) -> (i32, i32) {
    %c0_i32 = arith.constant 0 : i32
    %c0_i32_0 = arith.constant 0 : i32
    %c0_i32_1 = arith.constant 0 : i32
    return %c0_i32, %c0_i32_0 : i32, i32
  }
  func.func @transform_12(%arg0: i32) -> (i32, i32) {
    %c0_i32 = arith.constant 0 : i32
    %c0_i32_0 = arith.constant 0 : i32
    %c0_i32_1 = arith.constant 0 : i32
    return %c0_i32, %c0_i32_0 : i32, i32
  }
  func.func @transform_13(%arg0: i32) -> (i32, i32) {
    %c0_i32 = arith.constant 0 : i32
    %c0_i32_0 = arith.constant 0 : i32
    return %c0_i32, %arg0 : i32, i32
  }
}

</mosaic_0001>

<llo_original>
// kernel: tpu_custom_call.1
$region0: #{tpu_custom_call.1}
  #allocation0 [shape = 'u32[]', space=smem, size = 0x4, offset = 0x4, fixed_abs, tag = 'smem constant byte address 0x4 - core index']
  #allocation1 [shape = 'u32[72,128]{1,0:T(1,128)}', space=vmem, size = 0x9000, scoped, tag = 'internal scratch']
  %s0 = inlined_call_operand.hbm [shape: bf16[16,2048], index: 0, kind: input, shape index: {}]
  %s1 = inlined_call_operand.vmem [shape: bf16[8,16], index: 1, kind: input, shape index: {}]
  %s2 = inlined_call_operand.vmem [shape: f32[8,1], index: 2, kind: input, shape index: {}]
  %s3 = inlined_call_operand.vmem [shape: bf16[2,8], index: 3, kind: input, shape index: {}]
  %s4 = inlined_call_operand.vmem [shape: f32[2,1], index: 4, kind: input, shape index: {}]
  %s5 = inlined_call_operand.vmem [shape: bf16[8,2], index: 5, kind: input, shape index: {}]
  %s6 = inlined_call_operand.vmem [shape: f32[8,1], index: 6, kind: input, shape index: {}]
  %s7 = inlined_call_operand.vmem [shape: bf16[16,8], index: 7, kind: input, shape index: {}]
  %s8 = inlined_call_operand.vmem [shape: f32[16,1], index: 8, kind: input, shape index: {}]
  %s9 = inlined_call_operand.vmem [shape: f32[16,1], index: 9, kind: input, shape index: {}]
  %s10 = inlined_call_operand.vmem [shape: f32[16,16], index: 10, kind: input, shape index: {}]
  %s11 = inlined_call_operand.vmem [shape: f32[8,16], index: 11, kind: input, shape index: {}]
  %s12 = inlined_call_operand.vmem [shape: f32[8,1], index: 12, kind: input, shape index: {}]
  %s13 = inlined_call_operand.hbm [shape: f32[1,2048], index: 13, kind: output, shape index: {}]
  %s14 = sld [smem:[#allocation0]]
  $region89: #{tpu_custom_call.1} parent=0
    _
  %s16 = ssub.s32 1, %s14
  %s17 = scalar_select 0, %s16, %s14
  $region1: #{tpu_custom_call.1} parent=0
    #allocation2 [shape = 'u8[32768]{0}', space=vmem, size = 0x8000, scoped, tag = 'input window, operand 0']
    #allocation3 [shape = 's32[2]{0}', space=sflag, size = 0x8, scoped, tag = 'scoped memory for tpu_custom_call.1']
    #allocation4 [shape = 's32[2]{0}', space=sflag, size = 0x8, scoped, tag = 'scoped memory for tpu_custom_call.1']
    #allocation5 [shape = 'u8[4096]{0}', space=vmem, size = 0x1000, scoped, tag = 'output window, operand 0']
    %18 = vsyncpa [#allocation3], 0
    %s19 = scalar_lea.sflag [#allocation3], 1
    %20 = vsyncpa %s19, 0
    %21 = vsyncpa [#allocation4], 0
    %s22 = scalar_lea.sflag [#allocation4], 1
    %23 = vsyncpa %s22, 0
    loop: start=0, step=1, limit=6
    $region2: #{tpu_custom_call.1} parent=1 // loop_pre_header
      _
    $region3: #{tpu_custom_call.1} parent=1 // loop_header
      %s25 = sphi 0, %s29
      %p26 = scmp.ge.s32.totalorder %s25, 6
      %s35 = sphi 0, %s37
      %s38 = sphi 0, %s35
      %s39 = sphi 0, %s38
      %s55 = sphi 0, %s39
      %s59 = sphi 0, %s59
      %s61 = sphi 0, %s59
      %s62 = sphi 0, %s61
      %s76 = sphi 0, %s62
      %s80 = sphi 0, %s80
      %s82 = sphi 0, %s80
      %s83 = sphi 0, %s82
      %s97 = sphi 0, %s83
      %s101 = sphi 0, %s101
      %s103 = sphi 0, %s101
      %s104 = sphi 0, %s103
      %s118 = sphi 0, %s104
      %s122 = sphi 0, %s122
      %s124 = sphi 0, %s122
      %s125 = sphi 0, %s124
      %s139 = sphi 0, %s125
      %s143 = sphi 0, %s143
      %s145 = sphi 0, %s143
      %s146 = sphi 0, %s145
      %s160 = sphi 0, %s146
      %s164 = sphi 0, %s164
      %s166 = sphi 0, %s164
      %s167 = sphi 0, %s166
      %s181 = sphi 0, %s167
      %s185 = sphi 0, %s185
      %s187 = sphi 0, %s185
      %s188 = sphi 0, %s187
      %s202 = sphi 0, %s188
      %s206 = sphi 0, %s206
      %s208 = sphi 0, %s206
      %s209 = sphi 0, %s208
      %s223 = sphi 0, %s209
      %s227 = sphi 0, %s227
      %s229 = sphi 0, %s227
      %s230 = sphi 0, %s229
      %s244 = sphi 0, %s230
      %s248 = sphi 0, %s248
      %s250 = sphi 0, %s248
      %s251 = sphi 0, %s250
      %s265 = sphi 0, %s251
      %s269 = sphi 0, %s269
      %s271 = sphi 0, %s269
      %s272 = sphi 0, %s271
      %s286 = sphi 0, %s272
      %s290 = sphi 0, %s290
      %s292 = sphi 0, %s290
      %s293 = sphi 0, %s292
      %s307 = sphi 0, %s293
      %s313 = sphi 0, %s315
      %s316 = sphi 0, %s313
      %s317 = sphi 0, %s316
      %s333 = sphi 0, %s317
    $region4: #{tpu_custom_call.1} parent=1 // loop_header_branch
      %28 = sbr.rel (%p26) target = $region8
    $region5: #{tpu_custom_call.1} parent=1 // loop_body
      %s30 = ssub.s32 %s25, 1
      %s31 = ssub.s32 %s25, 2
      %s32 = sadd.s32 %s25, 1
      %s33 = ssub.s32 %s25, %s32
      %p34 = scmp.eq.s32.totalorder %s33, 0
      %s36 = sadd.s32 %s35, 1
      %s37 = scalar_select %p34, %s35, %s36
      %p40 = pneg %p34
      %p41 = scmp.eq.s32.totalorder %s25, 3
      %p42 = por %p40, %p41
      %p43 = scmp.ne.s32.totalorder %s35, %s38
      %p44 = scmp.eq.s32.totalorder %s25, 0
      %p45 = por %p43, %p44
      %p46 = scmp.ne.s32.totalorder %s35, %s38
      %p47 = scmp.eq.s32.totalorder %s30, 3
      %p48 = por %p46, %p47
      %p49 = scmp.ne.s32.totalorder %s38, %s39
      %p50 = scmp.eq.s32.totalorder %s30, 0
      %p51 = por %p49, %p50
      %p52 = scmp.ne.s32.totalorder %s38, %s39
      %p53 = scmp.eq.s32.totalorder %s31, 3
      %p54 = por %p52, %p53
      %p56 = scmp.ne.s32.totalorder %s39, %s55
      %p57 = scmp.eq.s32.totalorder %s31, 0
      %p58 = por %p56, %p57
      %s60 = sadd.s32 %s59, 1
      %p63 = scmp.eq.s32.totalorder %s25, 3
      %p64 = scmp.ne.s32.totalorder %s59, %s61
      %p65 = scmp.eq.s32.totalorder %s25, 0
      %p66 = por %p64, %p65
      %p67 = scmp.ne.s32.totalorder %s59, %s61
      %p68 = scmp.eq.s32.totalorder %s30, 3
      %p69 = por %p67, %p68
      %p70 = scmp.ne.s32.totalorder %s61, %s62
      %p71 = scmp.eq.s32.totalorder %s30, 0
      %p72 = por %p70, %p71
      %p73 = scmp.ne.s32.totalorder %s61, %s62
      %p74 = scmp.eq.s32.totalorder %s31, 3
      %p75 = por %p73, %p74
      %p77 = scmp.ne.s32.totalorder %s62, %s76
      %p78 = scmp.eq.s32.totalorder %s31, 0
      %p79 = por %p77, %p78
      %s81 = sadd.s32 %s80, 1
      %p84 = scmp.eq.s32.totalorder %s25, 3
      %p85 = scmp.ne.s32.totalorder %s80, %s82
      %p86 = scmp.eq.s32.totalorder %s25, 0
      %p87 = por %p85, %p86
      %p88 = scmp.ne.s32.totalorder %s80, %s82
      %p89 = scmp.eq.s32.totalorder %s30, 3
      %p90 = por %p88, %p89
      %p91 = scmp.ne.s32.totalorder %s82, %s83
      %p92 = scmp.eq.s32.totalorder %s30, 0
      %p93 = por %p91, %p92
      %p94 = scmp.ne.s32.totalorder %s82, %s83
      %p95 = scmp.eq.s32.totalorder %s31, 3
      %p96 = por %p94, %p95
      %p98 = scmp.ne.s32.totalorder %s83, %s97
      %p99 = scmp.eq.s32.totalorder %s31, 0
      %p100 = por %p98, %p99
      %s102 = sadd.s32 %s101, 1
      %p105 = scmp.eq.s32.totalorder %s25, 3
      %p106 = scmp.ne.s32.totalorder %s101, %s103
      %p107 = scmp.eq.s32.totalorder %s25, 0
      %p108 = por %p106, %p107
      %p109 = scmp.ne.s32.totalorder %s101, %s103
      %p110 = scmp.eq.s32.totalorder %s30, 3
      %p111 = por %p109, %p110
      %p112 = scmp.ne.s32.totalorder %s103, %s104
      %p113 = scmp.eq.s32.totalorder %s30, 0
      %p114 = por %p112, %p113
      %p115 = scmp.ne.s32.totalorder %s103, %s104
      %p116 = scmp.eq.s32.totalorder %s31, 3
      %p117 = por %p115, %p116
      %p119 = scmp.ne.s32.totalorder %s104, %s118
      %p120 = scmp.eq.s32.totalorder %s31, 0
      %p121 = por %p119, %p120
      %s123 = sadd.s32 %s122, 1
      %p126 = scmp.eq.s32.totalorder %s25, 3
      %p127 = scmp.ne.s32.totalorder %s122, %s124
      %p128 = scmp.eq.s32.totalorder %s25, 0
      %p129 = por %p127, %p128
      %p130 = scmp.ne.s32.totalorder %s122, %s124
      %p131 = scmp.eq.s32.totalorder %s30, 3
      %p132 = por %p130, %p131
      %p133 = scmp.ne.s32.totalorder %s124, %s125
      %p134 = scmp.eq.s32.totalorder %s30, 0
      %p135 = por %p133, %p134
      %p136 = scmp.ne.s32.totalorder %s124, %s125
      %p137 = scmp.eq.s32.totalorder %s31, 3
      %p138 = por %p136, %p137
      %p140 = scmp.ne.s32.totalorder %s125, %s139
      %p141 = scmp.eq.s32.totalorder %s31, 0
      %p142 = por %p140, %p141
      %s144 = sadd.s32 %s143, 1
      %p147 = scmp.eq.s32.totalorder %s25, 3
      %p148 = scmp.ne.s32.totalorder %s143, %s145
      %p149 = scmp.eq.s32.totalorder %s25, 0
      %p150 = por %p148, %p149
      %p151 = scmp.ne.s32.totalorder %s143, %s145
      %p152 = scmp.eq.s32.totalorder %s30, 3
      %p153 = por %p151, %p152
      %p154 = scmp.ne.s32.totalorder %s145, %s146
      %p155 = scmp.eq.s32.totalorder %s30, 0
      %p156 = por %p154, %p155
      %p157 = scmp.ne.s32.totalorder %s145, %s146
      %p158 = scmp.eq.s32.totalorder %s31, 3
      %p159 = por %p157, %p158
      %p161 = scmp.ne.s32.totalorder %s146, %s160
      %p162 = scmp.eq.s32.totalorder %s31, 0
      %p163 = por %p161, %p162
      %s165 = sadd.s32 %s164, 1
      %p168 = scmp.eq.s32.totalorder %s25, 3
      %p169 = scmp.ne.s32.totalorder %s164, %s166
      %p170 = scmp.eq.s32.totalorder %s25, 0
      %p171 = por %p169, %p170
      %p172 = scmp.ne.s32.totalorder %s164, %s166
      %p173 = scmp.eq.s32.totalorder %s30, 3
      %p174 = por %p172, %p173
      %p175 = scmp.ne.s32.totalorder %s166, %s167
      %p176 = scmp.eq.s32.totalorder %s30, 0
      %p177 = por %p175, %p176
      %p178 = scmp.ne.s32.totalorder %s166, %s167
      %p179 = scmp.eq.s32.totalorder %s31, 3
      %p180 = por %p178, %p179
      %p182 = scmp.ne.s32.totalorder %s167, %s181
      %p183 = scmp.eq.s32.totalorder %s31, 0
      %p184 = por %p182, %p183
      %s186 = sadd.s32 %s185, 1
      %p189 = scmp.eq.s32.totalorder %s25, 3
      %p190 = scmp.ne.s32.totalorder %s185, %s187
      %p191 = scmp.eq.s32.totalorder %s25, 0
      %p192 = por %p190, %p191
      %p193 = scmp.ne.s32.totalorder %s185, %s187
      %p194 = scmp.eq.s32.totalorder %s30, 3
      %p195 = por %p193, %p194
      %p196 = scmp.ne.s32.totalorder %s187, %s188
      %p197 = scmp.eq.s32.totalorder %s30, 0
      %p198 = por %p196, %p197
      %p199 = scmp.ne.s32.totalorder %s187, %s188
      %p200 = scmp.eq.s32.totalorder %s31, 3
      %p201 = por %p199, %p200
      %p203 = scmp.ne.s32.totalorder %s188, %s202
      %p204 = scmp.eq.s32.totalorder %s31, 0
      %p205 = por %p203, %p204
      %s207 = sadd.s32 %s206, 1
      %p210 = scmp.eq.s32.totalorder %s25, 3
      %p211 = scmp.ne.s32.totalorder %s206, %s208
      %p212 = scmp.eq.s32.totalorder %s25, 0
      %p213 = por %p211, %p212
      %p214 = scmp.ne.s32.totalorder %s206, %s208
      %p215 = scmp.eq.s32.totalorder %s30, 3
      %p216 = por %p214, %p215
      %p217 = scmp.ne.s32.totalorder %s208, %s209
      %p218 = scmp.eq.s32.totalorder %s30, 0
      %p219 = por %p217, %p218
      %p220 = scmp.ne.s32.totalorder %s208, %s209
      %p221 = scmp.eq.s32.totalorder %s31, 3
      %p222 = por %p220, %p221
      %p224 = scmp.ne.s32.totalorder %s209, %s223
      %p225 = scmp.eq.s32.totalorder %s31, 0
      %p226 = por %p224, %p225
      %s228 = sadd.s32 %s227, 1
      %p231 = scmp.eq.s32.totalorder %s25, 3
      %p232 = scmp.ne.s32.totalorder %s227, %s229
      %p233 = scmp.eq.s32.totalorder %s25, 0
      %p234 = por %p232, %p233
      %p235 = scmp.ne.s32.totalorder %s227, %s229
      %p236 = scmp.eq.s32.totalorder %s30, 3
      %p237 = por %p235, %p236
      %p238 = scmp.ne.s32.totalorder %s229, %s230
      %p239 = scmp.eq.s32.totalorder %s30, 0
      %p240 = por %p238, %p239
      %p241 = scmp.ne.s32.totalorder %s229, %s230
      %p242 = scmp.eq.s32.totalorder %s31, 3
      %p243 = por %p241, %p242
      %p245 = scmp.ne.s32.totalorder %s230, %s244
      %p246 = scmp.eq.s32.totalorder %s31, 0
      %p247 = por %p245, %p246
      %s249 = sadd.s32 %s248, 1
      %p252 = scmp.eq.s32.totalorder %s25, 3
      %p253 = scmp.ne.s32.totalorder %s248, %s250
      %p254 = scmp.eq.s32.totalorder %s25, 0
      %p255 = por %p253, %p254
      %p256 = scmp.ne.s32.totalorder %s248, %s250
      %p257 = scmp.eq.s32.totalorder %s30, 3
      %p258 = por %p256, %p257
      %p259 = scmp.ne.s32.totalorder %s250, %s251
      %p260 = scmp.eq.s32.totalorder %s30, 0
      %p261 = por %p259, %p260
      %p262 = scmp.ne.s32.totalorder %s250, %s251
      %p263 = scmp.eq.s32.totalorder %s31, 3
      %p264 = por %p262, %p263
      %p266 = scmp.ne.s32.totalorder %s251, %s265
      %p267 = scmp.eq.s32.totalorder %s31, 0
      %p268 = por %p266, %p267
      %s270 = sadd.s32 %s269, 1
      %p273 = scmp.eq.s32.totalorder %s25, 3
      %p274 = scmp.ne.s32.totalorder %s269, %s271
      %p275 = scmp.eq.s32.totalorder %s25, 0
      %p276 = por %p274, %p275
      %p277 = scmp.ne.s32.totalorder %s269, %s271
      %p278 = scmp.eq.s32.totalorder %s30, 3
      %p279 = por %p277, %p278
      %p280 = scmp.ne.s32.totalorder %s271, %s272
      %p281 = scmp.eq.s32.totalorder %s30, 0
      %p282 = por %p280, %p281
      %p283 = scmp.ne.s32.totalorder %s271, %s272
      %p284 = scmp.eq.s32.totalorder %s31, 3
      %p285 = por %p283, %p284
      %p287 = scmp.ne.s32.totalorder %s272, %s286
      %p288 = scmp.eq.s32.totalorder %s31, 0
      %p289 = por %p287, %p288
      %s291 = sadd.s32 %s290, 1
      %p294 = scmp.eq.s32.totalorder %s25, 3
      %p295 = scmp.ne.s32.totalorder %s290, %s292
      %p296 = scmp.eq.s32.totalorder %s25, 0
      %p297 = por %p295, %p296
      %p298 = scmp.ne.s32.totalorder %s290, %s292
      %p299 = scmp.eq.s32.totalorder %s30, 3
      %p300 = por %p298, %p299
      %p301 = scmp.ne.s32.totalorder %s292, %s293
      %p302 = scmp.eq.s32.totalorder %s30, 0
      %p303 = por %p301, %p302
      %p304 = scmp.ne.s32.totalorder %s292, %s293
      %p305 = scmp.eq.s32.totalorder %s31, 3
      %p306 = por %p304, %p305
      %p308 = scmp.ne.s32.totalorder %s293, %s307
      %p309 = scmp.eq.s32.totalorder %s31, 0
      %p310 = por %p308, %p309
      %s311 = ssub.s32 %s25, %s32
      %p312 = scmp.eq.s32.totalorder %s311, 0
      %s314 = sadd.s32 %s313, 1
      %s315 = scalar_select %p312, %s313, %s314
      %p318 = pneg %p312
      %p319 = scmp.eq.s32.totalorder %s25, 3
      %p320 = por %p318, %p319
      %p321 = scmp.ne.s32.totalorder %s313, %s316
      %p322 = scmp.eq.s32.totalorder %s25, 0
      %p323 = por %p321, %p322
      %p324 = scmp.ne.s32.totalorder %s313, %s316
      %p325 = scmp.eq.s32.totalorder %s30, 3
      %p326 = por %p324, %p325
      %p327 = scmp.ne.s32.totalorder %s316, %s317
      %p328 = scmp.eq.s32.totalorder %s30, 0
      %p329 = por %p327, %p328
      %p330 = scmp.ne.s32.totalorder %s316, %s317
      %p331 = scmp.eq.s32.totalorder %s31, 3
      %p332 = por %p330, %p331
      %p334 = scmp.ne.s32.totalorder %s317, %s333
      %p335 = scmp.eq.s32.totalorder %s31, 0
      %p336 = por %p334, %p335
      %p337 = scmp.le.s32.totalorder 1, %s25
      %p338 = scmp.lt.s32.totalorder %s25, 5
      %p339 = pnand %p337, %p338
      %p340 = pneg %p339
      // Predicated region
      $region9: #{tpu_custom_call.1} parent=5 // pred_check
        _
      $region10: #{tpu_custom_call.1} parent=5 // pred_check_branch
        %342 = sbr.rel (%p339) target = $region12
      $region11: #{tpu_custom_call.1} parent=5 // pred_region
        %s343 = ssub.s32 %s25, 1
        // Predicated region
        $region13: #{tpu_custom_call.1} parent=11 // pred_check
          %p344 = pneg %p72
        $region14: #{tpu_custom_call.1} parent=11 // pred_check_branch
          %346 = sbr.rel (%p344) target = $region16
        $region15: #{tpu_custom_call.1} parent=11 // pred_region
          _
        $region16: #{tpu_custom_call.1} parent=11 // pred_fallthru
          _
        // Predicated region
        $region17: #{tpu_custom_call.1} parent=11 // pred_check
          %p347 = pneg %p93
        $region18: #{tpu_custom_call.1} parent=11 // pred_check_branch
          %349 = sbr.rel (%p347) target = $region20
        $region19: #{tpu_custom_call.1} parent=11 // pred_region
          _
        $region20: #{tpu_custom_call.1} parent=11 // pred_fallthru
          _
        // Predicated region
        $region21: #{tpu_custom_call.1} parent=11 // pred_check
          %p350 = pneg %p114
        $region22: #{tpu_custom_call.1} parent=11 // pred_check_branch
          %352 = sbr.rel (%p350) target = $region24
        $region23: #{tpu_custom_call.1} parent=11 // pred_region
          _
        $region24: #{tpu_custom_call.1} parent=11 // pred_fallthru
          _
        // Predicated region
        $region25: #{tpu_custom_call.1} parent=11 // pred_check
          %p353 = pneg %p135
        $region26: #{tpu_custom_call.1} parent=11 // pred_check_branch
          %355 = sbr.rel (%p353) target = $region28
        $region27: #{tpu_custom_call.1} parent=11 // pred_region
          _
        $region28: #{tpu_custom_call.1} parent=11 // pred_fallthru
          _
        // Predicated region
        $region29: #{tpu_custom_call.1} parent=11 // pred_check
          %p356 = pneg %p156
        $region30: #{tpu_custom_call.1} parent=11 // pred_check_branch
          %358 = sbr.rel (%p356) target = $region32
        $region31: #{tpu_custom_call.1} parent=11 // pred_region
          _
        $region32: #{tpu_custom_call.1} parent=11 // pred_fallthru
          _
        // Predicated region
        $region33: #{tpu_custom_call.1} parent=11 // pred_check
          %p359 = pneg %p177
        $region34: #{tpu_custom_call.1} parent=11 // pred_check_branch
          %361 = sbr.rel (%p359) target = $region36
        $region35: #{tpu_custom_call.1} parent=11 // pred_region
          _
        $region36: #{tpu_custom_call.1} parent=11 // pred_fallthru
          _
        // Predicated region
        $region37: #{tpu_custom_call.1} parent=11 // pred_check
          %p362 = pneg %p198
        $region38: #{tpu_custom_call.1} parent=11 // pred_check_branch
          %364 = sbr.rel (%p362) target = $region40
        $region39: #{tpu_custom_call.1} parent=11 // pred_region
          _
        $region40: #{tpu_custom_call.1} parent=11 // pred_fallthru
          _
        // Predicated region
        $region41: #{tpu_custom_call.1} parent=11 // pred_check
          %p365 = pneg %p219
        $region42: #{tpu_custom_call.1} parent=11 // pred_check_branch
          %367 = sbr.rel (%p365) target = $region44
        $region43: #{tpu_custom_call.1} parent=11 // pred_region
          _
        $region44: #{tpu_custom_call.1} parent=11 // pred_fallthru
          _
        // Predicated region
        $region45: #{tpu_custom_call.1} parent=11 // pred_check
          %p368 = pneg %p240
        $region46: #{tpu_custom_call.1} parent=11 // pred_check_branch
          %370 = sbr.rel (%p368) target = $region48
        $region47: #{tpu_custom_call.1} parent=11 // pred_region
          _
        $region48: #{tpu_custom_call.1} parent=11 // pred_fallthru
          _
        // Predicated region
        $region49: #{tpu_custom_call.1} parent=11 // pred_check
          %p371 = pneg %p261
        $region50: #{tpu_custom_call.1} parent=11 // pred_check_branch
          %373 = sbr.rel (%p371) target = $region52
        $region51: #{tpu_custom_call.1} parent=11 // pred_region
          _
        $region52: #{tpu_custom_call.1} parent=11 // pred_fallthru
          _
        // Predicated region
        $region53: #{tpu_custom_call.1} parent=11 // pred_check
          %p374 = pneg %p282
        $region54: #{tpu_custom_call.1} parent=11 // pred_check_branch
          %376 = sbr.rel (%p374) target = $region56
        $region55: #{tpu_custom_call.1} parent=11 // pred_region
          _
        $region56: #{tpu_custom_call.1} parent=11 // pred_fallthru
          _
        // Predicated region
        $region57: #{tpu_custom_call.1} parent=11 // pred_check
          %p377 = pneg %p303
        $region58: #{tpu_custom_call.1} parent=11 // pred_check_branch
          %379 = sbr.rel (%p377) target = $region60
        $region59: #{tpu_custom_call.1} parent=11 // pred_region
          _
        $region60: #{tpu_custom_call.1} parent=11 // pred_fallthru
          _
      $region12: #{tpu_custom_call.1} parent=5 // pred_fallthru
        _
      %p380 = scmp.lt.s32.totalorder %s25, 4
      // Predicated region
      $region61: #{tpu_custom_call.1} parent=5 // pred_check
        %p381 = pneg %p380
      $region62: #{tpu_custom_call.1} parent=5 // pred_check_branch
        %383 = sbr.rel (%p381) target = $region64
      $region63: #{tpu_custom_call.1} parent=5 // pred_region
        // Predicated region
        $region65: #{tpu_custom_call.1} parent=63 // pred_check
          %p384 = pneg %p45
        $region66: #{tpu_custom_call.1} parent=63 // pred_check_branch
          %386 = sbr.rel (%p384) target = $region68
        $region67: #{tpu_custom_call.1} parent=63 // pred_region
          %s387 = sand.u32 %s35, 1
          %s388 = scalar_lea.sflag [#allocation3], %s387
          %s389 = sand.u32 %s35, 1
          %s390 = smul.addr %s389, 32
          %s391 = scalar_lea.vmem [#allocation2], %s390
          %s392 = smul.u32 4, %s25
          %394 = vsyncadd %s388, 0
          %s395 = smul.addr %s392, 4
          %s396 = scalar_lea.hbm %s0, %s395
          %s397 = sshll.u32 %s396, 4
          %s398 = int_to_ptr.hbm [resolvable:$true] %s397
          %s399 = sshll.u32 %s391, 4
          %s400 = int_to_ptr.vmem [resolvable:$true] %s399
          %405 = dma.hbm_to_vmem [thread:$0]  %s398, 512, %s400, %s388, 1024, 256, 16
        $region68: #{tpu_custom_call.1} parent=63 // pred_fallthru
          _
      $region64: #{tpu_custom_call.1} parent=5 // pred_fallthru
        _
      %p406 = scmp.le.s32.totalorder 1, %s25
      %p407 = scmp.lt.s32.totalorder %s25, 5
      %p408 = pnand %p406, %p407
      %p409 = pneg %p408
      // Predicated region
      $region69: #{tpu_custom_call.1} parent=5 // pred_check
        _
      $region70: #{tpu_custom_call.1} parent=5 // pred_check_branch
        %411 = sbr.rel (%p408) target = $region72
      $region71: #{tpu_custom_call.1} parent=5 // pred_region
        %s412 = ssub.s32 %s25, 1
        %s413 = sand.u32 %s38, 1
        %s414 = scalar_lea.sflag [#allocation3], %s413
        %s415 = sand.u32 %s38, 1
        %s416 = smul.addr %s415, 32
        %s417 = scalar_lea.vmem [#allocation2], %s416
        // Predicated region
        $region73: #{tpu_custom_call.1} parent=71 // pred_check
          %p418 = pneg %p51
        $region74: #{tpu_custom_call.1} parent=71 // pred_check_branch
          %420 = sbr.rel (%p418) target = $region76
        $region75: #{tpu_custom_call.1} parent=71 // pred_region
          %422 = dma.done %s414, 512
        $region76: #{tpu_custom_call.1} parent=71 // pred_fallthru
          _
        %s423 = sand.u32 %s38, 1
        %s424 = scalar_lea.sflag [#allocation3], %s423
        %s425 = sand.u32 %s38, 1
        %s426 = smul.addr %s425, 32
        %s427 = scalar_lea.vmem [#allocation2], %s426
        %p428 = pneg %p51
        %p429 = pneg %p48
        %p430 = pneg %p72
        %p431 = pneg %p69
        %p432 = pneg %p93
        %p433 = pneg %p90
        %p434 = pneg %p114
        %p435 = pneg %p111
        %p436 = pneg %p135
        %p437 = pneg %p132
        %p438 = pneg %p156
        %p439 = pneg %p153
        %p440 = pneg %p177
        %p441 = pneg %p174
        %p442 = pneg %p198
        %p443 = pneg %p195
        %p444 = pneg %p219
        %p445 = pneg %p216
        %p446 = pneg %p240
        %p447 = pneg %p237
        %p448 = pneg %p261
        %p449 = pneg %p258
        %p450 = pneg %p282
        %p451 = pneg %p279
        %p452 = pneg %p303
        %p453 = pneg %p300
        %p454 = pneg %p329
        %p455 = pneg %p326
        %s456 = sand.u32 %s316, 1
        %s457 = scalar_lea.sflag [#allocation4], %s456
        %s458 = sand.u32 %s316, 1
        %s459 = smul.addr %s458, 4
        %s460 = scalar_lea.vmem [#allocation5], %s459
        %s461 = smul.u32 4, %s30
        %s462 = smul.u32 4, %s30
        %v464 = vld [vmem:[%s417] sm:$0xff]
        %v465 = vld [vmem:[%s417 + $0x8] sm:$0xff]
        %v466 = vld [vmem:[%s417 + $0x10] sm:$0xff]
        %v467 = vld [vmem:[%s417 + $0x18] sm:$0xff]
        %v468 = vld [vmem:[%s1] sm:$0xf]
        %v469 = vld [vmem:[%s2] sm:$0xff]
        %471 = vset.pattern.permute.xlu0 0
        %472 = vperm.xlu0 %471, %v469
        %v473 = vpop.permute.xlu0 %472
        %v479 = vunpack.c.l.b16 %v464
        %v480 = vunpack.c.h.b16 %v464
        %v481 = vunpack.c.l.b16 %v465
        %v482 = vunpack.c.h.b16 %v465
        %v483 = vunpack.c.l.b16 %v466
        %v484 = vunpack.c.h.b16 %v466
        %v485 = vunpack.c.l.b16 %v467
        %v486 = vunpack.c.h.b16 %v467
        %v487 = vpack.c.b16 %v483, %v479
        %v488 = vpack.c.b16 %v484, %v480
        %v489 = vpack.c.b16 %v485, %v481
        %v490 = vpack.c.b16 %v486, %v482
        %vm495 = vcmask 130048
        %v497 = vsel %vm495, %v468, 0
        %499 = vmatpush.bf16.msra.mxu0 0
        %500 = vmatpush.bf16.msra.mxu0 0
        %501 = vmatpush.bf16.msra.mxu0 0
        %502 = vmatpush.bf16.msra.mxu0 0
        %503 = vmatpush.bf16.msra.mxu0 0
        %504 = vmatpush.bf16.msra.mxu0 0
        %505 = vmatpush.bf16.msra.mxu0 0
        %506 = vmatpush.bf16.msra.mxu0 %v487
        %507 = vmatmul.bf16.gmra.mxu0 %v497
        %v508 = vpop.f32.mrf.mxu0
        %v509 = vadd.f32 %v473, %v508
        %v510 = vpop.f32.mrf.mxu0
        %511 = vdwg.mxu0
        %512 = vmatpush.bf16.msra.mxu0 0
        %513 = vmatpush.bf16.msra.mxu0 0
        %514 = vmatpush.bf16.msra.mxu0 0
        %515 = vmatpush.bf16.msra.mxu0 0
        %516 = vmatpush.bf16.msra.mxu0 0
        %517 = vmatpush.bf16.msra.mxu0 0
        %518 = vmatpush.bf16.msra.mxu0 0
        %519 = vmatpush.bf16.msra.mxu0 %v488
        %520 = vmatmul.bf16.gmra.mxu0 %v497
        %v521 = vpop.f32.mrf.mxu0
        %v522 = vadd.f32 %v473, %v521
        %v523 = vpop.f32.mrf.mxu0
        %524 = vdwg.mxu0
        %525 = vmatpush.bf16.msra.mxu0 0
        %526 = vmatpush.bf16.msra.mxu0 0
        %527 = vmatpush.bf16.msra.mxu0 0
        %528 = vmatpush.bf16.msra.mxu0 0
        %529 = vmatpush.bf16.msra.mxu0 0
        %530 = vmatpush.bf16.msra.mxu0 0
        %531 = vmatpush.bf16.msra.mxu0 0
        %532 = vmatpush.bf16.msra.mxu0 %v489
        %533 = vmatmul.bf16.gmra.mxu0 %v497
        %v534 = vpop.f32.mrf.mxu0
        %v535 = vadd.f32 %v473, %v534
        %v536 = vpop.f32.mrf.mxu0
        %537 = vdwg.mxu0
        %538 = vmatpush.bf16.msra.mxu0 0
        %539 = vmatpush.bf16.msra.mxu0 0
        %540 = vmatpush.bf16.msra.mxu0 0
        %541 = vmatpush.bf16.msra.mxu0 0
        %542 = vmatpush.bf16.msra.mxu0 0
        %543 = vmatpush.bf16.msra.mxu0 0
        %544 = vmatpush.bf16.msra.mxu0 0
        %545 = vmatpush.bf16.msra.mxu0 %v490
        %546 = vmatmul.bf16.gmra.mxu0 %v497
        %v547 = vpop.f32.mrf.mxu0
        %v548 = vadd.f32 %v473, %v547
        %v549 = vpop.f32.mrf.mxu0
        %550 = vdwg.mxu0
        %v551 = vpack.c.bf16 %v509, %v509
        %v552 = vpack.c.bf16 %v522, %v522
        %v553 = vpack.c.bf16 %v535, %v535
        %v554 = vpack.c.bf16 %v548, %v548
        %v555 = vunpack.c.l.bf16 %v551
        %v556 = vunpack.c.l.bf16 %v552
        %v557 = vunpack.c.l.bf16 %v553
        %v558 = vunpack.c.l.bf16 %v554
        %v559 = vtanh.pop %v555
        %v560 = vtanh.pop %v556
        %v561 = vtanh.pop %v557
        %v562 = vtanh.pop %v558
        %v563 = vpack.c.bf16 %v559, %v559
        %v564 = vpack.c.bf16 %v560, %v560
        %v565 = vpack.c.bf16 %v561, %v561
        %v566 = vpack.c.bf16 %v562, %v562
        %v567 = vld [vmem:[%s3] sm:$0x1]
        %v568 = vld [vmem:[%s4] sm:$0x3]
        %570 = vset.pattern.permute.xlu0 0
        %571 = vperm.xlu0 %570, %v568
        %v572 = vpop.permute.xlu0 %571
        %vm574 = vcmask 64512
        %v576 = vsel %vm574, %v567, 0
        %vm578 = vcmask 1043456
        %v580 = vsel %vm578, %v563, 0
        %v583 = vsel %vm578, %v564, 0
        %v586 = vsel %vm578, %v565, 0
        %v589 = vsel %vm578, %v566, 0
        %591 = vmatpush.bf16.msra.mxu0 0
        %592 = vmatpush.bf16.msra.mxu0 0
        %593 = vmatpush.bf16.msra.mxu0 0
        %594 = vmatpush.bf16.msra.mxu0 0
        %595 = vmatpush.bf16.msra.mxu0 0
        %596 = vmatpush.bf16.msra.mxu0 0
        %597 = vmatpush.bf16.msra.mxu0 0
        %598 = vmatpush.bf16.msra.mxu0 %v580
        %599 = vmatmul.bf16.gmra.mxu0 %v576
        %v600 = vpop.f32.mrf.mxu0
        %v601 = vadd.f32 %v572, %v600
        %v602 = vpop.f32.mrf.mxu0
        %603 = vdwg.mxu0
        %604 = vmatpush.bf16.msra.mxu0 0
        %605 = vmatpush.bf16.msra.mxu0 0
        %606 = vmatpush.bf16.msra.mxu0 0
        %607 = vmatpush.bf16.msra.mxu0 0
        %608 = vmatpush.bf16.msra.mxu0 0
        %609 = vmatpush.bf16.msra.mxu0 0
        %610 = vmatpush.bf16.msra.mxu0 0
        %611 = vmatpush.bf16.msra.mxu0 %v583
        %612 = vmatmul.bf16.gmra.mxu0 %v576
        %v613 = vpop.f32.mrf.mxu0
        %v614 = vadd.f32 %v572, %v613
        %v615 = vpop.f32.mrf.mxu0
        %616 = vdwg.mxu0
        %617 = vmatpush.bf16.msra.mxu0 0
        %618 = vmatpush.bf16.msra.mxu0 0
        %619 = vmatpush.bf16.msra.mxu0 0
        %620 = vmatpush.bf16.msra.mxu0 0
        %621 = vmatpush.bf16.msra.mxu0 0
        %622 = vmatpush.bf16.msra.mxu0 0
        %623 = vmatpush.bf16.msra.mxu0 0
        %624 = vmatpush.bf16.msra.mxu0 %v586
        %625 = vmatmul.bf16.gmra.mxu0 %v576
        %v626 = vpop.f32.mrf.mxu0
        %v627 = vadd.f32 %v572, %v626
        %v628 = vpop.f32.mrf.mxu0
        %629 = vdwg.mxu0
        %630 = vmatpush.bf16.msra.mxu0 0
        %631 = vmatpush.bf16.msra.mxu0 0
        %632 = vmatpush.bf16.msra.mxu0 0
        %633 = vmatpush.bf16.msra.mxu0 0
        %634 = vmatpush.bf16.msra.mxu0 0
        %635 = vmatpush.bf16.msra.mxu0 0
        %636 = vmatpush.bf16.msra.mxu0 0
        %637 = vmatpush.bf16.msra.mxu0 %v589
        %638 = vmatmul.bf16.gmra.mxu0 %v576
        %v639 = vpop.f32.mrf.mxu0
        %v640 = vadd.f32 %v572, %v639
        %v641 = vpop.f32.mrf.mxu0
        %642 = vdwg.mxu0
        %v643 = vpack.c.bf16 %v601, %v601
        %v644 = vpack.c.bf16 %v614, %v614
        %v645 = vpack.c.bf16 %v627, %v627
        %v646 = vpack.c.bf16 %v640, %v640
        %v647 = vld [vmem:[%s5] sm:$0xf]
        %v648 = vld [vmem:[%s6] sm:$0xff]
        %650 = vset.pattern.permute.xlu0 0
        %651 = vperm.xlu0 %650, %v648
        %v652 = vpop.permute.xlu0 %651
        %vm654 = vcmask 15360
        %v656 = vsel %vm654, %v647, 0
        %vm658 = vcmask 1040384
        %v660 = vsel %vm658, %v643, 0
        %v663 = vsel %vm658, %v644, 0
        %v666 = vsel %vm658, %v645, 0
        %v669 = vsel %vm658, %v646, 0
        %671 = vmatpush.bf16.msra.mxu0 0
        %672 = vmatpush.bf16.msra.mxu0 0
        %673 = vmatpush.bf16.msra.mxu0 0
        %674 = vmatpush.bf16.msra.mxu0 0
        %675 = vmatpush.bf16.msra.mxu0 0
        %676 = vmatpush.bf16.msra.mxu0 0
        %677 = vmatpush.bf16.msra.mxu0 0
        %678 = vmatpush.bf16.msra.mxu0 %v660
        %679 = vmatmul.bf16.gmra.mxu0 %v656
        %v680 = vpop.f32.mrf.mxu0
        %v681 = vadd.f32 %v652, %v680
        %v682 = vpop.f32.mrf.mxu0
        %683 = vdwg.mxu0
        %684 = vmatpush.bf16.msra.mxu0 0
        %685 = vmatpush.bf16.msra.mxu0 0
        %686 = vmatpush.bf16.msra.mxu0 0
        %687 = vmatpush.bf16.msra.mxu0 0
        %688 = vmatpush.bf16.msra.mxu0 0
        %689 = vmatpush.bf16.msra.mxu0 0
        %690 = vmatpush.bf16.msra.mxu0 0
        %691 = vmatpush.bf16.msra.mxu0 %v663
        %692 = vmatmul.bf16.gmra.mxu0 %v656
        %v693 = vpop.f32.mrf.mxu0
        %v694 = vadd.f32 %v652, %v693
        %v695 = vpop.f32.mrf.mxu0
        %696 = vdwg.mxu0
        %697 = vmatpush.bf16.msra.mxu0 0
        %698 = vmatpush.bf16.msra.mxu0 0
        %699 = vmatpush.bf16.msra.mxu0 0
        %700 = vmatpush.bf16.msra.mxu0 0
        %701 = vmatpush.bf16.msra.mxu0 0
        %702 = vmatpush.bf16.msra.mxu0 0
        %703 = vmatpush.bf16.msra.mxu0 0
        %704 = vmatpush.bf16.msra.mxu0 %v666
        %705 = vmatmul.bf16.gmra.mxu0 %v656
        %v706 = vpop.f32.mrf.mxu0
        %v707 = vadd.f32 %v652, %v706
        %v708 = vpop.f32.mrf.mxu0
        %709 = vdwg.mxu0
        %710 = vmatpush.bf16.msra.mxu0 0
        %711 = vmatpush.bf16.msra.mxu0 0
        %712 = vmatpush.bf16.msra.mxu0 0
        %713 = vmatpush.bf16.msra.mxu0 0
        %714 = vmatpush.bf16.msra.mxu0 0
        %715 = vmatpush.bf16.msra.mxu0 0
        %716 = vmatpush.bf16.msra.mxu0 0
        %717 = vmatpush.bf16.msra.mxu0 %v669
        %718 = vmatmul.bf16.gmra.mxu0 %v656
        %v719 = vpop.f32.mrf.mxu0
        %v720 = vadd.f32 %v652, %v719
        %v721 = vpop.f32.mrf.mxu0
        %722 = vdwg.mxu0
        %v723 = vpack.c.bf16 %v681, %v681
        %v724 = vpack.c.bf16 %v694, %v694
        %v725 = vpack.c.bf16 %v707, %v707
        %v726 = vpack.c.bf16 %v720, %v720
        %v727 = vunpack.c.l.bf16 %v723
        %v728 = vunpack.c.l.bf16 %v724
        %v729 = vunpack.c.l.bf16 %v725
        %v730 = vunpack.c.l.bf16 %v726
        %v731 = vtanh.pop %v727
        %v732 = vtanh.pop %v728
        %v733 = vtanh.pop %v729
        %v734 = vtanh.pop %v730
        %v735 = vpack.c.bf16 %v731, %v731
        %v736 = vpack.c.bf16 %v732, %v732
        %v737 = vpack.c.bf16 %v733, %v733
        %v738 = vpack.c.bf16 %v734, %v734
        %v739 = vld [vmem:[%s7] sm:$0xf]
        %v740 = vld [vmem:[%s7 + $0x4] sm:$0xf]
        %v741 = vld [vmem:[%s8] sm:$0xff]
        %v742 = vld [vmem:[%s8 + $0x8] sm:$0xff]
        %744 = vset.pattern.permute.xlu0 0
        %745 = vperm.xlu0 %744, %v741
        %v746 = vpop.permute.xlu0 %745
        %749 = vset.pattern.permute.xlu0 0
        %750 = vperm.xlu0 %749, %v742
        %v751 = vpop.permute.xlu0 %750
        %v755 = vunpack.c.l.b16 %v739
        %v756 = vunpack.c.l.b16 %v740
        %v757 = vpack.c.b16 %v756, %v755
        %v759 = vsel %vm574, %v757, 0
        %v762 = vsel %vm578, %v735, 0
        %v765 = vsel %vm578, %v736, 0
        %v768 = vsel %vm578, %v737, 0
        %v771 = vsel %vm578, %v738, 0
        %773 = vmatpush.bf16.msra.mxu0 0
        %774 = vmatpush.bf16.msra.mxu0 0
        %775 = vmatpush.bf16.msra.mxu0 0
        %776 = vmatpush.bf16.msra.mxu0 0
        %777 = vmatpush.bf16.msra.mxu0 0
        %778 = vmatpush.bf16.msra.mxu0 0
        %779 = vmatpush.bf16.msra.mxu0 0
        %780 = vmatpush.bf16.msra.mxu0 %v762
        %781 = vmatmul.bf16.gmra.mxu0 %v759
        %v782 = vpop.f32.mrf.mxu0
        %v783 = vadd.f32 %v746, %v782
        %v784 = vpop.f32.mrf.mxu0
        %v785 = vadd.f32 %v751, %v784
        %786 = vdwg.mxu0
        %787 = vmatpush.bf16.msra.mxu0 0
        %788 = vmatpush.bf16.msra.mxu0 0
        %789 = vmatpush.bf16.msra.mxu0 0
        %790 = vmatpush.bf16.msra.mxu0 0
        %791 = vmatpush.bf16.msra.mxu0 0
        %792 = vmatpush.bf16.msra.mxu0 0
        %793 = vmatpush.bf16.msra.mxu0 0
        %794 = vmatpush.bf16.msra.mxu0 %v765
        %795 = vmatmul.bf16.gmra.mxu0 %v759
        %v796 = vpop.f32.mrf.mxu0
        %v797 = vadd.f32 %v746, %v796
        %v798 = vpop.f32.mrf.mxu0
        %v799 = vadd.f32 %v751, %v798
        %800 = vdwg.mxu0
        %801 = vmatpush.bf16.msra.mxu0 0
        %802 = vmatpush.bf16.msra.mxu0 0
        %803 = vmatpush.bf16.msra.mxu0 0
        %804 = vmatpush.bf16.msra.mxu0 0
        %805 = vmatpush.bf16.msra.mxu0 0
        %806 = vmatpush.bf16.msra.mxu0 0
        %807 = vmatpush.bf16.msra.mxu0 0
        %808 = vmatpush.bf16.msra.mxu0 %v768
        %809 = vmatmul.bf16.gmra.mxu0 %v759
        %v810 = vpop.f32.mrf.mxu0
        %v811 = vadd.f32 %v746, %v810
        %v812 = vpop.f32.mrf.mxu0
        %v813 = vadd.f32 %v751, %v812
        %814 = vdwg.mxu0
        %815 = vmatpush.bf16.msra.mxu0 0
        %816 = vmatpush.bf16.msra.mxu0 0
        %817 = vmatpush.bf16.msra.mxu0 0
        %818 = vmatpush.bf16.msra.mxu0 0
        %819 = vmatpush.bf16.msra.mxu0 0
        %820 = vmatpush.bf16.msra.mxu0 0
        %821 = vmatpush.bf16.msra.mxu0 0
        %822 = vmatpush.bf16.msra.mxu0 %v771
        %823 = vmatmul.bf16.gmra.mxu0 %v759
        %v824 = vpop.f32.mrf.mxu0
        %v825 = vadd.f32 %v746, %v824
        %v826 = vpop.f32.mrf.mxu0
        %v827 = vadd.f32 %v751, %v826
        %828 = vdwg.mxu0
        %v829 = vunpack.c.l.bf16 %v464
        %v830 = vunpack.c.h.bf16 %v464
        %v831 = vunpack.c.l.bf16 %v465
        %v832 = vunpack.c.h.bf16 %v465
        %v833 = vunpack.c.l.bf16 %v466
        %v834 = vunpack.c.h.bf16 %v466
        %v835 = vunpack.c.l.bf16 %v467
        %v836 = vunpack.c.h.bf16 %v467
        %v837 = vsub.f32 %v829, %v783
        %v838 = vsub.f32 %v830, %v797
        %v839 = vsub.f32 %v831, %v811
        %v840 = vsub.f32 %v832, %v825
        %v841 = vsub.f32 %v833, %v785
        %v842 = vsub.f32 %v834, %v799
        %v843 = vsub.f32 %v835, %v813
        %v844 = vsub.f32 %v836, %v827
        %v845 = vmul.f32 %v829, %v829
        %v846 = vmul.f32 %v830, %v830
        %v847 = vmul.f32 %v831, %v831
        %v848 = vmul.f32 %v832, %v832
        %v849 = vmul.f32 %v833, %v833
        %v850 = vmul.f32 %v834, %v834
        %v851 = vmul.f32 %v835, %v835
        %v852 = vmul.f32 %v836, %v836
        %v853 = vadd.f32 %v845, %v849
        %v854 = vrot.slane %v853, 4
        %v855 = vadd.f32 %v853, %v854
        %v856 = vrot.slane %v855, 2
        %v857 = vadd.f32 %v855, %v856
        %v858 = vrot.slane %v857, 1
        %v859 = vadd.f32 %v857, %v858
        %v860 = vadd.f32 %v846, %v850
        %v861 = vrot.slane %v860, 4
        %v862 = vadd.f32 %v860, %v861
        %v863 = vrot.slane %v862, 2
        %v864 = vadd.f32 %v862, %v863
        %v865 = vrot.slane %v864, 1
        %v866 = vadd.f32 %v864, %v865
        %v867 = vadd.f32 %v847, %v851
        %v868 = vrot.slane %v867, 4
        %v869 = vadd.f32 %v867, %v868
        %v870 = vrot.slane %v869, 2
        %v871 = vadd.f32 %v869, %v870
        %v872 = vrot.slane %v871, 1
        %v873 = vadd.f32 %v871, %v872
        %v874 = vadd.f32 %v848, %v852
        %v875 = vrot.slane %v874, 4
        %v876 = vadd.f32 %v874, %v875
        %v877 = vrot.slane %v876, 2
        %v878 = vadd.f32 %v876, %v877
        %v879 = vrot.slane %v878, 1
        %v880 = vadd.f32 %v878, %v879
        %v881 = vmul.f32 %v837, %v837
        %v882 = vmul.f32 %v838, %v838
        %v883 = vmul.f32 %v839, %v839
        %v884 = vmul.f32 %v840, %v840
        %v885 = vmul.f32 %v841, %v841
        %v886 = vmul.f32 %v842, %v842
        %v887 = vmul.f32 %v843, %v843
        %v888 = vmul.f32 %v844, %v844
        %v889 = vadd.f32 %v881, %v885
        %v890 = vrot.slane %v889, 4
        %v891 = vadd.f32 %v889, %v890
        %v892 = vrot.slane %v891, 2
        %v893 = vadd.f32 %v891, %v892
        %v894 = vrot.slane %v893, 1
        %v895 = vadd.f32 %v893, %v894
        %v896 = vadd.f32 %v882, %v886
        %v897 = vrot.slane %v896, 4
        %v898 = vadd.f32 %v896, %v897
        %v899 = vrot.slane %v898, 2
        %v900 = vadd.f32 %v898, %v899
        %v901 = vrot.slane %v900, 1
        %v902 = vadd.f32 %v900, %v901
        %v903 = vadd.f32 %v883, %v887
        %v904 = vrot.slane %v903, 4
        %v905 = vadd.f32 %v903, %v904
        %v906 = vrot.slane %v905, 2
        %v907 = vadd.f32 %v905, %v906
        %v908 = vrot.slane %v907, 1
        %v909 = vadd.f32 %v907, %v908
        %v910 = vadd.f32 %v884, %v888
        %v911 = vrot.slane %v910, 4
        %v912 = vadd.f32 %v910, %v911
        %v913 = vrot.slane %v912, 2
        %v914 = vadd.f32 %v912, %v913
        %v915 = vrot.slane %v914, 1
        %v916 = vadd.f32 %v914, %v915
        %v917 = vmax.f32 %v859, 1e-12
        %v918 = vmax.f32 %v866, 1e-12
        %v919 = vmax.f32 %v873, 1e-12
        %v920 = vmax.f32 %v880, 1e-12
        %v921 = vrcp.pop %v917
        %v922 = vmul.f32 %v917, %v921
        %v923 = vsub.f32 1.0, %v922
        %v924 = vmul.f32 %v921, %v923
        %v925 = vadd.f32 %v921, %v924
        %vm926 = vweird.f32 %v917
        %vm927 = vweird.f32 %v921
        %vm928 = vmor %vm926, %vm927
        %v929 = vsel %vm928, %v921, %v925
        %v930 = vand.u32 2147483647, %v917
        %vm931 = vcmp.eq.f32.partialorder %v930, 8.507059e+37
        %v932 = vand.u32 %v917, 2147483648
        %v933 = vor.u32 1.1754944e-38, %v932
        %v934 = vsel %vm931, %v933, %v929
        %v935 = vmul.f32 %v895, %v934
        %v936 = vrcp.pop %v918
        %v937 = vmul.f32 %v918, %v936
        %v938 = vsub.f32 1.0, %v937
        %v939 = vmul.f32 %v936, %v938
        %v940 = vadd.f32 %v936, %v939
        %vm941 = vweird.f32 %v918
        %vm942 = vweird.f32 %v936
        %vm943 = vmor %vm941, %vm942
        %v944 = vsel %vm943, %v936, %v940
        %v945 = vand.u32 2147483647, %v918
        %vm946 = vcmp.eq.f32.partialorder %v945, 8.507059e+37
        %v947 = vand.u32 %v918, 2147483648
        %v948 = vor.u32 1.1754944e-38, %v947
        %v949 = vsel %vm946, %v948, %v944
        %v950 = vmul.f32 %v902, %v949
        %v951 = vrcp.pop %v919
        %v952 = vmul.f32 %v919, %v951
        %v953 = vsub.f32 1.0, %v952
        %v954 = vmul.f32 %v951, %v953
        %v955 = vadd.f32 %v951, %v954
        %vm956 = vweird.f32 %v919
        %vm957 = vweird.f32 %v951
        %vm958 = vmor %vm956, %vm957
        %v959 = vsel %vm958, %v951, %v955
        %v960 = vand.u32 2147483647, %v919
        %vm961 = vcmp.eq.f32.partialorder %v960, 8.507059e+37
        %v962 = vand.u32 %v919, 2147483648
        %v963 = vor.u32 1.1754944e-38, %v962
        %v964 = vsel %vm961, %v963, %v959
        %v965 = vmul.f32 %v909, %v964
        %v966 = vrcp.pop %v920
        %v967 = vmul.f32 %v920, %v966
        %v968 = vsub.f32 1.0, %v967
        %v969 = vmul.f32 %v966, %v968
        %v970 = vadd.f32 %v966, %v969
        %vm971 = vweird.f32 %v920
        %vm972 = vweird.f32 %v966
        %vm973 = vmor %vm971, %vm972
        %v974 = vsel %vm973, %v966, %v970
        %v975 = vand.u32 2147483647, %v920
        %vm976 = vcmp.eq.f32.partialorder %v975, 8.507059e+37
        %v977 = vand.u32 %v920, 2147483648
        %v978 = vor.u32 1.1754944e-38, %v977
        %v979 = vsel %vm976, %v978, %v974
        %v980 = vmul.f32 %v916, %v979
        %v981 = vrsqrt.pop %v935
        %v982 = vmul.f32 %v981, %v935
        %v983 = vmul.f32 %v982, %v981
        %v984 = vmul.f32 0.5, %v983
        %v985 = vsub.f32 1.5, %v984
        %v986 = vmul.f32 %v981, %v985
        %v987 = vmul.f32 %v935, %v986
        %vm988 = vcmp.eq.f32.partialorder %v935, inf
        %v989 = vsel %vm988, %v935, %v987
        %vm990 = vcmp.eq.f32.partialorder %v935, 0.0
        %v991 = vand.u32 %v935, 2147483648
        %v992 = vsel %vm990, %v991, %v989
        %v993 = vrsqrt.pop %v950
        %v994 = vmul.f32 %v993, %v950
        %v995 = vmul.f32 %v994, %v993
        %v996 = vmul.f32 0.5, %v995
        %v997 = vsub.f32 1.5, %v996
        %v998 = vmul.f32 %v993, %v997
        %v999 = vmul.f32 %v950, %v998
        %vm1000 = vcmp.eq.f32.partialorder %v950, inf
        %v1001 = vsel %vm1000, %v950, %v999
        %vm1002 = vcmp.eq.f32.partialorder %v950, 0.0
        %v1003 = vand.u32 %v950, 2147483648
        %v1004 = vsel %vm1002, %v1003, %v1001
        %v1005 = vrsqrt.pop %v965
        %v1006 = vmul.f32 %v1005, %v965
        %v1007 = vmul.f32 %v1006, %v1005
        %v1008 = vmul.f32 0.5, %v1007
        %v1009 = vsub.f32 1.5, %v1008
        %v1010 = vmul.f32 %v1005, %v1009
        %v1011 = vmul.f32 %v965, %v1010
        %vm1012 = vcmp.eq.f32.partialorder %v965, inf
        %v1013 = vsel %vm1012, %v965, %v1011
        %vm1014 = vcmp.eq.f32.partialorder %v965, 0.0
        %v1015 = vand.u32 %v965, 2147483648
        %v1016 = vsel %vm1014, %v1015, %v1013
        %v1017 = vrsqrt.pop %v980
        %v1018 = vmul.f32 %v1017, %v980
        %v1019 = vmul.f32 %v1018, %v1017
        %v1020 = vmul.f32 0.5, %v1019
        %v1021 = vsub.f32 1.5, %v1020
        %v1022 = vmul.f32 %v1017, %v1021
        %v1023 = vmul.f32 %v980, %v1022
        %vm1024 = vcmp.eq.f32.partialorder %v980, inf
        %v1025 = vsel %vm1024, %v980, %v1023
        %vm1026 = vcmp.eq.f32.partialorder %v980, 0.0
        %v1027 = vand.u32 %v980, 2147483648
        %v1028 = vsel %vm1026, %v1027, %v1025
        %vm1029 = vcmask 1041408
        %v1030 = vsel %vm1029, %v601, %v992
        %v1031 = vsel %vm1029, %v614, %v1004
        %v1032 = vsel %vm1029, %v627, %v1016
        %v1033 = vsel %vm1029, %v640, %v1028
        %vm1034 = vcmask 1042432
        %v1035 = vsel %vm1034, %v1030, %v992
        %v1036 = vsel %vm1034, %v1031, %v1004
        %v1037 = vsel %vm1034, %v1032, %v1016
        %v1038 = vsel %vm1034, %v1033, %v1028
        %v1043 = vrot.slane %v1035, 4
        %v1044 = vrot.slane %v1036, 4
        %v1045 = vrot.slane %v1037, 4
        %v1046 = vrot.slane %v1038, 4
        %v1051 = vsel %vm578, %v1035, %v1043
        %v1052 = vsel %vm578, %v1036, %v1044
        %v1053 = vsel %vm578, %v1037, %v1045
        %v1054 = vsel %vm578, %v1038, %v1046
        %v1055 = vld [vmem:[%s9] sm:$0xff]
        %v1056 = vld [vmem:[%s9 + $0x8] sm:$0xff]
        %1058 = vset.pattern.permute.xlu0 0
        %1059 = vperm.xlu0 %1058, %v1055
        %v1060 = vpop.permute.xlu0 %1059
        %1063 = vset.pattern.permute.xlu0 0
        %1064 = vperm.xlu0 %1063, %v1056
        %v1065 = vpop.permute.xlu0 %1064
        %v1067 = vsub.f32 %v1051, %v1060
        %v1068 = vsub.f32 %v1052, %v1060
        %v1069 = vsub.f32 %v1053, %v1060
        %v1070 = vsub.f32 %v1054, %v1060
        %v1071 = vsub.f32 %v1051, %v1065
        %v1072 = vsub.f32 %v1052, %v1065
        %v1073 = vsub.f32 %v1053, %v1065
        %v1074 = vsub.f32 %v1054, %v1065
        %v1075 = vld [vmem:[%s10] sm:$0xff]
        %v1076 = vld [vmem:[%s10 + $0x8] sm:$0xff]
        %v1078 = vsel %vm495, %v1075, 0
        %v1081 = vsel %vm495, %v1076, 0
        %1083 = vmatpush.msra.mxu0 0.0
        %1084 = vmatpush.msra.mxu0 0.0
        %1085 = vmatpush.msra.mxu0 0.0
        %1086 = vmatpush.msra.mxu0 0.0
        %1087 = vmatpush.msra.mxu0 0.0
        %1088 = vmatpush.msra.mxu0 0.0
        %1089 = vmatpush.msra.mxu0 0.0
        %1090 = vmatpush.msra.mxu0 0.0
        %1091 = vmatpush.msra.mxu0 0.0
        %1092 = vmatpush.msra.mxu0 0.0
        %1093 = vmatpush.msra.mxu0 0.0
        %1094 = vmatpush.msra.mxu0 0.0
        %1095 = vmatpush.msra.mxu0 0.0
        %1096 = vmatpush.msra.mxu0 0.0
        %1097 = vmatpush.msra.mxu0 %v1071
        %1098 = vmatpush.msra.mxu0 %v1067
        %1099 = vmatmul.f32.gmra.mxu0 %v1078
        %v1100 = vpop.f32.mrf.mxu0
        %v1101 = vadd.f32 0.0, %v1100
        %1102 = vmatmul.f32.gmra.mxu0 %v1081
        %v1103 = vpop.f32.mrf.mxu0
        %v1104 = vadd.f32 0.0, %v1103
        %1105 = vdwg.mxu0
        %1106 = vmatpush.msra.mxu0 0.0
        %1107 = vmatpush.msra.mxu0 0.0
        %1108 = vmatpush.msra.mxu0 0.0
        %1109 = vmatpush.msra.mxu0 0.0
        %1110 = vmatpush.msra.mxu0 0.0
        %1111 = vmatpush.msra.mxu0 0.0
        %1112 = vmatpush.msra.mxu0 0.0
        %1113 = vmatpush.msra.mxu0 0.0
        %1114 = vmatpush.msra.mxu0 0.0
        %1115 = vmatpush.msra.mxu0 0.0
        %1116 = vmatpush.msra.mxu0 0.0
        %1117 = vmatpush.msra.mxu0 0.0
        %1118 = vmatpush.msra.mxu0 0.0
        %1119 = vmatpush.msra.mxu0 0.0
        %1120 = vmatpush.msra.mxu0 %v1072
        %1121 = vmatpush.msra.mxu0 %v1068
        %1122 = vmatmul.f32.gmra.mxu0 %v1078
        %v1123 = vpop.f32.mrf.mxu0
        %v1124 = vadd.f32 0.0, %v1123
        %1125 = vmatmul.f32.gmra.mxu0 %v1081
        %v1126 = vpop.f32.mrf.mxu0
        %v1127 = vadd.f32 0.0, %v1126
        %1128 = vdwg.mxu0
        %1129 = vmatpush.msra.mxu0 0.0
        %1130 = vmatpush.msra.mxu0 0.0
        %1131 = vmatpush.msra.mxu0 0.0
        %1132 = vmatpush.msra.mxu0 0.0
        %1133 = vmatpush.msra.mxu0 0.0
        %1134 = vmatpush.msra.mxu0 0.0
        %1135 = vmatpush.msra.mxu0 0.0
        %1136 = vmatpush.msra.mxu0 0.0
        %1137 = vmatpush.msra.mxu0 0.0
        %1138 = vmatpush.msra.mxu0 0.0
        %1139 = vmatpush.msra.mxu0 0.0
        %1140 = vmatpush.msra.mxu0 0.0
        %1141 = vmatpush.msra.mxu0 0.0
        %1142 = vmatpush.msra.mxu0 0.0
        %1143 = vmatpush.msra.mxu0 %v1073
        %1144 = vmatpush.msra.mxu0 %v1069
        %1145 = vmatmul.f32.gmra.mxu0 %v1078
        %v1146 = vpop.f32.mrf.mxu0
        %v1147 = vadd.f32 0.0, %v1146
        %1148 = vmatmul.f32.gmra.mxu0 %v1081
        %v1149 = vpop.f32.mrf.mxu0
        %v1150 = vadd.f32 0.0, %v1149
        %1151 = vdwg.mxu0
        %1152 = vmatpush.msra.mxu0 0.0
        %1153 = vmatpush.msra.mxu0 0.0
        %1154 = vmatpush.msra.mxu0 0.0
        %1155 = vmatpush.msra.mxu0 0.0
        %1156 = vmatpush.msra.mxu0 0.0
        %1157 = vmatpush.msra.mxu0 0.0
        %1158 = vmatpush.msra.mxu0 0.0
        %1159 = vmatpush.msra.mxu0 0.0
        %1160 = vmatpush.msra.mxu0 0.0
        %1161 = vmatpush.msra.mxu0 0.0
        %1162 = vmatpush.msra.mxu0 0.0
        %1163 = vmatpush.msra.mxu0 0.0
        %1164 = vmatpush.msra.mxu0 0.0
        %1165 = vmatpush.msra.mxu0 0.0
        %1166 = vmatpush.msra.mxu0 %v1074
        %1167 = vmatpush.msra.mxu0 %v1070
        %1168 = vmatmul.f32.gmra.mxu0 %v1078
        %v1169 = vpop.f32.mrf.mxu0
        %v1170 = vadd.f32 0.0, %v1169
        %1171 = vmatmul.f32.gmra.mxu0 %v1081
        %v1172 = vpop.f32.mrf.mxu0
        %v1173 = vadd.f32 0.0, %v1172
        %1174 = vdwg.mxu0
        %v1175 = vld [vmem:[%s11] sm:$0xff]
        %v1176 = vmul.f32 %v1101, %v1067
        %v1177 = vmul.f32 %v1124, %v1068
        %v1178 = vmul.f32 %v1147, %v1069
        %v1179 = vmul.f32 %v1170, %v1070
        %v1180 = vmul.f32 %v1104, %v1071
        %v1181 = vmul.f32 %v1127, %v1072
        %v1182 = vmul.f32 %v1150, %v1073
        %v1183 = vmul.f32 %v1173, %v1074
        %v1184 = vld [vmem:[%s12] sm:$0xff]
        %1186 = vset.pattern.permute.xlu0 0
        %1187 = vperm.xlu0 %1186, %v1184
        %v1188 = vpop.permute.xlu0 %1187
        %v1191 = vsel %vm495, %v1175, 0
        %1193 = vmatpush.msra.mxu0 0.0
        %1194 = vmatpush.msra.mxu0 0.0
        %1195 = vmatpush.msra.mxu0 0.0
        %1196 = vmatpush.msra.mxu0 0.0
        %1197 = vmatpush.msra.mxu0 0.0
        %1198 = vmatpush.msra.mxu0 0.0
        %1199 = vmatpush.msra.mxu0 0.0
        %1200 = vmatpush.msra.mxu0 0.0
        %1201 = vmatpush.msra.mxu0 0.0
        %1202 = vmatpush.msra.mxu0 0.0
        %1203 = vmatpush.msra.mxu0 0.0
        %1204 = vmatpush.msra.mxu0 0.0
        %1205 = vmatpush.msra.mxu0 0.0
        %1206 = vmatpush.msra.mxu0 0.0
        %1207 = vmatpush.msra.mxu0 %v1180
        %1208 = vmatpush.msra.mxu0 %v1176
        %1209 = vmatmul.f32.gmra.mxu0 %v1191
        %v1210 = vpop.f32.mrf.mxu0
        %v1211 = vadd.f32 %v1188, %v1210
        %1212 = vdwg.mxu0
        %1213 = vmatpush.msra.mxu0 0.0
        %1214 = vmatpush.msra.mxu0 0.0
        %1215 = vmatpush.msra.mxu0 0.0
        %1216 = vmatpush.msra.mxu0 0.0
        %1217 = vmatpush.msra.mxu0 0.0
        %1218 = vmatpush.msra.mxu0 0.0
        %1219 = vmatpush.msra.mxu0 0.0
        %1220 = vmatpush.msra.mxu0 0.0
        %1221 = vmatpush.msra.mxu0 0.0
        %1222 = vmatpush.msra.mxu0 0.0
        %1223 = vmatpush.msra.mxu0 0.0
        %1224 = vmatpush.msra.mxu0 0.0
        %1225 = vmatpush.msra.mxu0 0.0
        %1226 = vmatpush.msra.mxu0 0.0
        %1227 = vmatpush.msra.mxu0 %v1181
        %1228 = vmatpush.msra.mxu0 %v1177
        %1229 = vmatmul.f32.gmra.mxu0 %v1191
        %v1230 = vpop.f32.mrf.mxu0
        %v1231 = vadd.f32 %v1188, %v1230
        %1232 = vdwg.mxu0
        %1233 = vmatpush.msra.mxu0 0.0
        %1234 = vmatpush.msra.mxu0 0.0
        %1235 = vmatpush.msra.mxu0 0.0
        %1236 = vmatpush.msra.mxu0 0.0
        %1237 = vmatpush.msra.mxu0 0.0
        %1238 = vmatpush.msra.mxu0 0.0
        %1239 = vmatpush.msra.mxu0 0.0
        %1240 = vmatpush.msra.mxu0 0.0
        %1241 = vmatpush.msra.mxu0 0.0
        %1242 = vmatpush.msra.mxu0 0.0
        %1243 = vmatpush.msra.mxu0 0.0
        %1244 = vmatpush.msra.mxu0 0.0
        %1245 = vmatpush.msra.mxu0 0.0
        %1246 = vmatpush.msra.mxu0 0.0
        %1247 = vmatpush.msra.mxu0 %v1182
        %1248 = vmatpush.msra.mxu0 %v1178
        %1249 = vmatmul.f32.gmra.mxu0 %v1191
        %v1250 = vpop.f32.mrf.mxu0
        %v1251 = vadd.f32 %v1188, %v1250
        %1252 = vdwg.mxu0
        %1253 = vmatpush.msra.mxu0 0.0
        %1254 = vmatpush.msra.mxu0 0.0
        %1255 = vmatpush.msra.mxu0 0.0
        %1256 = vmatpush.msra.mxu0 0.0
        %1257 = vmatpush.msra.mxu0 0.0
        %1258 = vmatpush.msra.mxu0 0.0
        %1259 = vmatpush.msra.mxu0 0.0
        %1260 = vmatpush.msra.mxu0 0.0
        %1261 = vmatpush.msra.mxu0 0.0
        %1262 = vmatpush.msra.mxu0 0.0
        %1263 = vmatpush.msra.mxu0 0.0
        %1264 = vmatpush.msra.mxu0 0.0
        %1265 = vmatpush.msra.mxu0 0.0
        %1266 = vmatpush.msra.mxu0 0.0
        %1267 = vmatpush.msra.mxu0 %v1183
        %1268 = vmatpush.msra.mxu0 %v1179
        %1269 = vmatmul.f32.gmra.mxu0 %v1191
        %v1270 = vpop.f32.mrf.mxu0
        %v1271 = vadd.f32 %v1188, %v1270
        %1272 = vdwg.mxu0
        %v1273 = vrot.slane %v1211, 4
        %v1274 = vmax.f32 %v1211, %v1273
        %v1275 = vrot.slane %v1274, 2
        %v1276 = vmax.f32 %v1274, %v1275
        %v1277 = vrot.slane %v1276, 1
        %v1278 = vmax.f32 %v1276, %v1277
        %v1279 = vrot.slane %v1231, 4
        %v1280 = vmax.f32 %v1231, %v1279
        %v1281 = vrot.slane %v1280, 2
        %v1282 = vmax.f32 %v1280, %v1281
        %v1283 = vrot.slane %v1282, 1
        %v1284 = vmax.f32 %v1282, %v1283
        %v1285 = vrot.slane %v1251, 4
        %v1286 = vmax.f32 %v1251, %v1285
        %v1287 = vrot.slane %v1286, 2
        %v1288 = vmax.f32 %v1286, %v1287
        %v1289 = vrot.slane %v1288, 1
        %v1290 = vmax.f32 %v1288, %v1289
        %v1291 = vrot.slane %v1271, 4
        %v1292 = vmax.f32 %v1271, %v1291
        %v1293 = vrot.slane %v1292, 2
        %v1294 = vmax.f32 %v1292, %v1293
        %v1295 = vrot.slane %v1294, 1
        %v1296 = vmax.f32 %v1294, %v1295
        %v1297 = vsub.f32 %v1211, %v1278
        %v1298 = vsub.f32 %v1231, %v1284
        %v1299 = vsub.f32 %v1251, %v1290
        %v1300 = vsub.f32 %v1271, %v1296
        %v1301 = vmul.f32 %v1297, 1.442695
        %v1302 = vpow.pop %v1301
        %v1303 = vmul.f32 %v1298, 1.442695
        %v1304 = vpow.pop %v1303
        %v1305 = vmul.f32 %v1299, 1.442695
        %v1306 = vpow.pop %v1305
        %v1307 = vmul.f32 %v1300, 1.442695
        %v1308 = vpow.pop %v1307
        %v1309 = vrot.slane %v1302, 4
        %v1310 = vadd.f32 %v1302, %v1309
        %v1311 = vrot.slane %v1310, 2
        %v1312 = vadd.f32 %v1310, %v1311
        %v1313 = vrot.slane %v1312, 1
        %v1314 = vadd.f32 %v1312, %v1313
        %v1315 = vrot.slane %v1304, 4
        %v1316 = vadd.f32 %v1304, %v1315
        %v1317 = vrot.slane %v1316, 2
        %v1318 = vadd.f32 %v1316, %v1317
        %v1319 = vrot.slane %v1318, 1
        %v1320 = vadd.f32 %v1318, %v1319
        %v1321 = vrot.slane %v1306, 4
        %v1322 = vadd.f32 %v1306, %v1321
        %v1323 = vrot.slane %v1322, 2
        %v1324 = vadd.f32 %v1322, %v1323
        %v1325 = vrot.slane %v1324, 1
        %v1326 = vadd.f32 %v1324, %v1325
        %v1327 = vrot.slane %v1308, 4
        %v1328 = vadd.f32 %v1308, %v1327
        %v1329 = vrot.slane %v1328, 2
        %v1330 = vadd.f32 %v1328, %v1329
        %v1331 = vrot.slane %v1330, 1
        %v1332 = vadd.f32 %v1330, %v1331
        %v1333 = vlog2.pop %v1314
        %v1334 = vmul.f32 %v1333, 0.6931472
        %v1335 = vlog2.pop %v1320
        %v1336 = vmul.f32 %v1335, 0.6931472
        %v1337 = vlog2.pop %v1326
        %v1338 = vmul.f32 %v1337, 0.6931472
        %v1339 = vlog2.pop %v1332
        %v1340 = vmul.f32 %v1339, 0.6931472
        %v1341 = vadd.f32 %v1278, %v1334
        %v1342 = vadd.f32 %v1284, %v1336
        %v1343 = vadd.f32 %v1290, %v1338
        %v1344 = vadd.f32 %v1296, %v1340
        %v1345 = vsub.f32 0.0, %v1341
        %v1346 = vsub.f32 0.0, %v1342
        %v1347 = vsub.f32 0.0, %v1343
        %v1348 = vsub.f32 0.0, %v1344
        %v1353 = vrot.slane %v1346, 7
        %v1354 = vrot.slane %v1347, 6
        %v1355 = vrot.slane %v1348, 5
        %v1356 = vsel %vm658, %v1345, %v1353
        %vm1357 = vcmask 1042434
        %v1358 = vsel %vm1357, %v1354, %v1355
        %v1359 = vsel %vm1029, %v1356, %v1358
        %v1361 = vlaneseq
        %vm1362 = vcmp.ge.s32.totalorder %v1361, 0
        %vm1363 = vcmp.lt.s32.totalorder %v1361, 512
        %vm1364 = vmand %vm1362, %vm1363
        %1365 = vst.msk [vmem:[%s460] sm:$0xf] %vm1364, %v1359
        %s1366 = sand.u32 %s316, 1
        %s1367 = scalar_lea.sflag [#allocation4], %s1366
        %s1368 = sand.u32 %s316, 1
        %s1369 = smul.addr %s1368, 4
        %s1370 = scalar_lea.vmem [#allocation5], %s1369
        // Predicated region
        $region77: #{tpu_custom_call.1} parent=71 // pred_check
          %p1371 = pneg %p326
        $region78: #{tpu_custom_call.1} parent=71 // pred_check_branch
          %1373 = sbr.rel (%p1371) target = $region80
        $region79: #{tpu_custom_call.1} parent=71 // pred_region
          %s1374 = smul.u32 4, %s30
          %1376 = vsyncadd %s1367, 0
          %s1377 = scalar_lea.hbm %s13, %s1374
          %s1379 = sshll.u32 %s1370, 4
          %s1380 = int_to_ptr.vmem [resolvable:$true] %s1379
          %s1381 = sshll.u32 %s1377, 4
          %s1382 = int_to_ptr.hbm [resolvable:$true] %s1381
          %1384 = dma.vmem_to_hbm [thread:$0]  %s1380, 64, %s1382, %s1367
        $region80: #{tpu_custom_call.1} parent=71 // pred_fallthru
          _
      $region72: #{tpu_custom_call.1} parent=5 // pred_fallthru
        _
      %p1385 = scmp.le.s32.totalorder 2, %s25
      // Predicated region
      $region81: #{tpu_custom_call.1} parent=5 // pred_check
        %p1386 = pneg %p1385
      $region82: #{tpu_custom_call.1} parent=5 // pred_check_branch
        %1388 = sbr.rel (%p1386) target = $region84
      $region83: #{tpu_custom_call.1} parent=5 // pred_region
        %s1389 = ssub.s32 %s25, 2
        // Predicated region
        $region85: #{tpu_custom_call.1} parent=83 // pred_check
          %p1390 = pneg %p332
        $region86: #{tpu_custom_call.1} parent=83 // pred_check_branch
          %1392 = sbr.rel (%p1390) target = $region88
        $region87: #{tpu_custom_call.1} parent=83 // pred_region
          %s1393 = sand.u32 %s317, 1
          %s1394 = scalar_lea.sflag [#allocation4], %s1393
          %s1395 = sand.u32 %s317, 1
          %s1396 = smul.addr %s1395, 4
          %s1397 = scalar_lea.vmem [#allocation5], %s1396
          %1399 = dma.done %s1394, 64
        $region88: #{tpu_custom_call.1} parent=83 // pred_fallthru
          _
      $region84: #{tpu_custom_call.1} parent=5 // pred_fallthru
        _
    $region6: #{tpu_custom_call.1} parent=1 // loop_footer
      %s29 = sadd.s32 1, %s25
    $region7: #{tpu_custom_call.1} parent=1 // loop_footer_branch
      %24 = sbr.rel target = $region3
    $region8: #{tpu_custom_call.1} parent=1 // loop_exit
      _
    %1400 = vsyncpa [#allocation3], 1
    %s1401 = scalar_lea.sflag [#allocation3], 1
    %1402 = vsyncpa %s1401, 1
    %1403 = vsyncpa [#allocation4], 1
    %s1404 = scalar_lea.sflag [#allocation4], 1
    %1405 = vsyncpa %s1404, 1

</llo_original>
